<compile_context>
chip_gen: v6e
topology: v6e:2x2x1
jax: 0.10.0
libtpu: 0.0.40
codegen_flags: <defaults>
</compile_context>

<pallas_src>
import jax
import jax.numpy as jnp
from jax.experimental import pallas as pl
from jax.experimental.pallas import tpu as pltpu

KERNEL_SIZE = 5
LEFT_PAD = 4  # the module prepends 4 zero timesteps (causal-style left pad)


# ----------------------------------------------------------------------------- kernels
def _conv_relu_store(pad_ref, wc_ref, bc_ref, o_ref):
    """Conv1d(H, H, 5) + bias + ReLU on a left-padded hidden scratch.

    pad_ref: (Bt, L+4, Hp) bf16   left-zero-padded hidden sequence
    wc_ref : (K, Hp, Hp)   bf16   tap-k weight wc_ref[k][in, out]
    bc_ref : (1, Hp)       f32    conv bias
    o_ref  : (Bt, L, Hp)          output block (lane-dense Hp)
    """
    Bt, Lp4, Hp = pad_ref.shape
    L = Lp4 - LEFT_PAD

    acc = jnp.zeros((Bt * L, Hp), jnp.float32)
    # 5 accumulating per-tap matmuls on shifted slices (no im2col concat temp).
    for k in range(KERNEL_SIZE):
        tap = pad_ref[:, k:k + L, :].reshape(Bt * L, Hp)
        acc = acc + jnp.dot(tap, wc_ref[k], preferred_element_type=jnp.float32)
    acc = acc + bc_ref[...]                                   # f32 bias (broadcast)

    o_ref[...] = jnp.maximum(acc, 0.0).reshape(Bt, L, Hp).astype(o_ref.dtype)


def _ncnn_kernel_transfer(x_ref, wt_ref, bt_ref, wc_ref, bc_ref, o_ref, pad_ref):
    # x_ref  : (Bt, L, E)  bf16 input slab
    # wt_ref : (E, Hp)     bf16 transfer (Linear) weight, zero-padded out dim
    # bt_ref : (1, Hp)     f32  transfer bias, zero-padded
    Bt, L, E = x_ref.shape
    Hp = o_ref.shape[2]

    # Linear transfer: (Bt*L, E) @ (E, Hp) + b   (bf16 operands, f32 accumulate)
    h = jnp.dot(x_ref[...].reshape(Bt * L, E), wt_ref[...],
                preferred_element_type=jnp.float32)
    h = h + bt_ref[...]

    # Left-padded hidden sequence: [zeros(4, Hp); h].  Only the 4 pad rows are zeroed
    # (rows [4:] fully overwritten); re-zeroed every step so the kernel stays correct
    # when the "parallel" batch axis is sharded across TensorCores.
    pad_ref[:, :LEFT_PAD, :] = jnp.zeros((Bt, LEFT_PAD, Hp), jnp.bfloat16)
    pad_ref[:, LEFT_PAD:, :] = h.astype(jnp.bfloat16).reshape(Bt, L, Hp)

    _conv_relu_store(pad_ref, wc_ref, bc_ref, o_ref)


def _ncnn_kernel_identity(x_ref, wc_ref, bc_ref, o_ref, pad_ref):
    # Identity transfer (embed_dim == hidden_dim): x already bf16 + channel-padded
    # to Hp in the wrapper; skip the Linear matmul entirely.
    Bt, L, Hp = x_ref.shape
    pad_ref[:, :LEFT_PAD, :] = jnp.zeros((Bt, LEFT_PAD, Hp), jnp.bfloat16)
    pad_ref[:, LEFT_PAD:, :] = x_ref[...]
    _conv_relu_store(pad_ref, wc_ref, bc_ref, o_ref)


# ----------------------------------------------------------------------------- tiling
def _vmem_budget_bytes():
    """Usable VMEM budget for this generation (leave headroom for the compiler)."""
    try:
        cap = pltpu.get_tpu_info().vmem_capacity_bytes   # v5e/v6e 128 MiB, v7x 64 MiB/TC
    except Exception:
        cap = 64 * 1024 * 1024
    return int(min(cap * 0.75, 100 * 1024 * 1024))


def _pick_batch_tile(B, L, Hp, E_in, vmem_limit_bytes, target_rows=512):
    """Batch elements per grid step.

    Targets >= target_rows matmul rows per step (amortize ~600-cycle step overhead,
    fill the 256-wide v6e/v7x MXU at least twice), capped by the VMEM budget and so
    the grid has >= 2 steps (keeps v7x's second TensorCore busy). B is later padded
    up to a multiple of Bt in the wrapper, so Bt never degenerates to 1 for awkward B.
    """
    def vmem_bytes(bt):
        x_b = 2 * bt * L * E_in * 2                 # bf16 x, double-buffered
        o_b = 2 * bt * L * Hp * 4                   # f32 out, double-buffered
        pad_b = bt * (L + LEFT_PAD) * Hp * 2        # bf16 scratch
        w_b = (KERNEL_SIZE * Hp * Hp + E_in * Hp) * 2 + 2 * Hp * 4  # single-buffered weights
        return x_b + o_b + pad_b + w_b

    bt = max(1, pl.cdiv(target_rows, max(L, 1)))
    bt = min(bt, B)
    if B >= 2:
        bt = min(bt, (B + 1) // 2)                  # ensure >= 2 grid steps
    while bt > 1 and vmem_bytes(bt) > vmem_limit_bytes:
        bt = max(1, bt // 2)
    return bt


# ----------------------------------------------------------------------------- wrapper
def ncnn_forward(x, w_transfer, b_transfer, w_conv, b_conv, *, out_dtype=jnp.float32):
    """x: (B, L, E) float32/bfloat16. Returns (B, L, H) `out_dtype`.

    w_transfer: (E, H) or None (module skips the Linear when embed_dim == hidden_dim)
    b_transfer: (H,)   or None
    w_conv    : (H, H, K) PyTorch Conv1d weight layout (out_ch, in_ch, K)
    b_conv    : (H,)
    """
    B, L, E = x.shape
    H = w_conv.shape[0]
    identity = w_transfer is None
    if identity:
        assert E == H, "identity transfer requires embed_dim == hidden_dim"

    # Lane-dense channel dim: pad H up to a multiple of 128 with inert zeros.
    Hp = ((H + 127) // 128) * 128

    # Conv1d weight (out, in, K) -> (K, in, out), zero-pad both channel dims (bf16).
    wc = jnp.transpose(w_conv, (2, 1, 0))                               # (K, H, H)
    wc_pad = jnp.zeros((KERNEL_SIZE, Hp, Hp), jnp.bfloat16)
    wc_pad = wc_pad.at[:, :H, :H].set(wc.astype(jnp.bfloat16))
    bc = jnp.zeros((1, Hp), jnp.float32).at[:, :H].set(b_conv.astype(jnp.float32))

    if not identity:
        wt = jnp.zeros((E, Hp), jnp.bfloat16).at[:, :H].set(w_transfer.astype(jnp.bfloat16))
        bt_bias = jnp.zeros((1, Hp), jnp.float32).at[:, :H].set(b_transfer.astype(jnp.float32))

    # Input: bf16 (halves x DMA + double-buffered VMEM); identity path pads channels
    # to Hp (inert zeros — the padded in-channel conv weights are zero).
    x_bf = x.astype(jnp.bfloat16)
    E_in = E
    if identity and Hp != E:
        x_bf = jnp.pad(x_bf, ((0, 0), (0, 0), (0, Hp - E)))
        E_in = Hp

    vmem_budget = _vmem_budget_bytes()
    Bt = _pick_batch_tile(B, L, Hp, E_in, vmem_budget)
    Bp = pl.cdiv(B, Bt) * Bt
    if Bp != B:                                     # pad batch (zero rows, sliced off)
        x_bf = jnp.pad(x_bf, ((0, Bp - B), (0, 0), (0, 0)))
    grid = (Bp // Bt,)

    def _build_and_run(single_buffer_weights):
        wmode = {"pipeline_mode": pl.Buffered(1)} if single_buffer_weights else {}
        if identity:
            kernel = _ncnn_kernel_identity
            in_specs = [
                pl.BlockSpec((Bt, L, Hp), lambda b: (b, 0, 0)),                       # x
                pl.BlockSpec((KERNEL_SIZE, Hp, Hp), lambda b: (0, 0, 0), **wmode),    # W_conv
                pl.BlockSpec((1, Hp), lambda b: (0, 0), **wmode),                     # b_conv
            ]
            args = (x_bf, wc_pad, bc)
        else:
            kernel = _ncnn_kernel_transfer
            in_specs = [
                pl.BlockSpec((Bt, L, E), lambda b: (b, 0, 0)),                        # x
                pl.BlockSpec((E, Hp), lambda b: (0, 0), **wmode),                     # W_transfer
                pl.BlockSpec((1, Hp), lambda b: (0, 0), **wmode),                     # b_transfer
                pl.BlockSpec((KERNEL_SIZE, Hp, Hp), lambda b: (0, 0, 0), **wmode),    # W_conv
                pl.BlockSpec((1, Hp), lambda b: (0, 0), **wmode),                     # b_conv
            ]
            args = (x_bf, wt, bt_bias, wc_pad, bc)

        return pl.pallas_call(
            kernel,
            out_shape=jax.ShapeDtypeStruct((Bp, L, Hp), out_dtype),
            grid_spec=pltpu.PrefetchScalarGridSpec(
                num_scalar_prefetch=0,
                grid=grid,
                in_specs=in_specs,
                out_specs=pl.BlockSpec((Bt, L, Hp), lambda b: (b, 0, 0)),
                scratch_shapes=[pltpu.VMEM((Bt, L + LEFT_PAD, Hp), jnp.bfloat16)],
            ),
            compiler_params=pltpu.CompilerParams(
                dimension_semantics=("parallel",),
                vmem_limit_bytes=vmem_budget,
            ),
        )(*args)

    try:
        out = _build_and_run(True)
    except Exception:
        # Fallback for Pallas versions that reject single-buffered inputs.
        out = _build_and_run(False)

    if Bp != B or Hp != H:
        out = out[:B, :, :H]
    return out


# ----------------------------------------------------------------------------- reference
def ncnn_reference(x, w_transfer, b_transfer, w_conv, b_conv):
    """Pure-JAX f32 reference mirroring the PyTorch forward."""
    h = x if w_transfer is None else x @ w_transfer + b_transfer        # (B, L, H)
    B, L, H = h.shape
    pad = jnp.concatenate([jnp.zeros((B, LEFT_PAD, H), h.dtype), h], axis=1)
    out = jnp.zeros((B, L, H), jnp.float32)
    for k in range(KERNEL_SIZE):
        out = out + jnp.einsum('blc,oc->blo', pad[:, k:k + L, :], w_conv[:, :, k])
    out = out + b_conv
    return jnp.maximum(out, 0.0)


if __name__ == "__main__":
    key = jax.random.PRNGKey(0)
    k_x, k_wt, k_bt, k_wc, k_bc, k_x2, k_wc2, k_bc2 = jax.random.split(key, 8)

    # --- Case 1: embed_dim != hidden_dim -> Linear "transfer" path is exercised ---
    B, L, E, H = 2, 8, 16, 32
    x = jax.random.normal(k_x, (B, L, E), dtype=jnp.float32)
    # nn.Linear(E, H): torch weight is (H, E); store transposed as (E, H) for x @ W.
    w_transfer = jax.random.normal(k_wt, (E, H), dtype=jnp.float32) * 0.1
    b_transfer = jax.random.normal(k_bt, (H,), dtype=jnp.float32) * 0.1
    # nn.Conv1d(H, H, 5): weight (out_ch, in_ch, K), bias (out_ch,)
    w_conv = jax.random.normal(k_wc, (H, H, KERNEL_SIZE), dtype=jnp.float32) * 0.1
    b_conv = jax.random.normal(k_bc, (H,), dtype=jnp.float32) * 0.1

    out = jax.block_until_ready(ncnn_forward(x, w_transfer, b_transfer, w_conv, b_conv))
    ref = ncnn_reference(x, w_transfer, b_transfer, w_conv, b_conv)
    assert out.shape == (B, L, H)
    # bf16 matmul operands with f32 accumulation -> compare loosely vs the f32 reference.
    assert jnp.allclose(out, ref, atol=5e-2, rtol=5e-2)

    # --- Case 2: embed_dim == hidden_dim -> identity transfer (Linear skipped) ---
    H2 = 32
    x2 = jax.random.normal(k_x2, (B, L, H2), dtype=jnp.float32)
    w_conv2 = jax.random.normal(k_wc2, (H2, H2, KERNEL_SIZE), dtype=jnp.float32) * 0.1
    b_conv2 = jax.random.normal(k_bc2, (H2,), dtype=jnp.float32) * 0.1

    out2 = jax.block_until_ready(ncnn_forward(x2, None, None, w_conv2, b_conv2))
    ref2 = ncnn_reference(x2, None, None, w_conv2, b_conv2)
    assert out2.shape == (B, L, H2)
    assert jnp.allclose(out2, ref2, atol=5e-2, rtol=5e-2)

    print("KERNEL_OK")
</pallas_src>

<mosaic_0001>
module attributes {stable_mosaic.version = 11 : i64} {
  func.func @_ncnn_kernel_transfer(%arg0: i32, %arg1: memref<1x8x16xbf16, #tpu.memory_space<vmem>>, %arg2: memref<16x128xbf16, #tpu.memory_space<vmem>>, %arg3: memref<1x128xf32, #tpu.memory_space<vmem>>, %arg4: memref<5x128x128xbf16, #tpu.memory_space<vmem>>, %arg5: memref<1x128xf32, #tpu.memory_space<vmem>>, %arg6: memref<1x8x128xf32, #tpu.memory_space<vmem>>, %arg7: memref<1x12x128xbf16, #tpu.memory_space<vmem>>) attributes {dimension_semantics = [#tpu.dimension_semantics<parallel>], iteration_bounds = array<i64: 2>, scalar_prefetch = 0 : i64, scratch_operands = 1 : i64, tpu.core_type = #tpu.core_type<tc>, window_params = [{transform_indices = @transform_0, window_bounds = array<i64: 1, 8, 16>}, {pipeline_mode = #tpu.pipeline_mode<synchronous>, transform_indices = @transform_1, window_bounds = array<i64: 16, 128>}, {pipeline_mode = #tpu.pipeline_mode<synchronous>, transform_indices = @transform_2, window_bounds = array<i64: 1, 128>}, {pipeline_mode = #tpu.pipeline_mode<synchronous>, transform_indices = @transform_3, window_bounds = array<i64: 5, 128, 128>}, {pipeline_mode = #tpu.pipeline_mode<synchronous>, transform_indices = @transform_4, window_bounds = array<i64: 1, 128>}, {transform_indices = @transform_5, window_bounds = array<i64: 1, 8, 128>}]} {
    %c0 = arith.constant 0 : index
    %c0_0 = arith.constant 0 : index
    %c0_1 = arith.constant 0 : index
    %0 = vector.load %arg1[%c0, %c0_0, %c0_1] : memref<1x8x16xbf16, #tpu.memory_space<vmem>>, vector<1x8x16xbf16>
    %1 = vector.shape_cast %0 : vector<1x8x16xbf16> to vector<8x16xbf16>
    %c0_2 = arith.constant 0 : index
    %c0_3 = arith.constant 0 : index
    %2 = vector.load %arg2[%c0_2, %c0_3] : memref<16x128xbf16, #tpu.memory_space<vmem>>, vector<16x128xbf16>
    %cst = arith.constant dense<0.000000e+00> : vector<8x128xf32>
    %3 = tpu.matmul %1, %2, %cst {dimension_numbers = #tpu.dot_dimension_numbers<[1], [0], [0], [1], [0, 0, 1, 1], [], []>} : vector<8x16xbf16>, vector<16x128xbf16>, vector<8x128xf32> -> vector<8x128xf32>
    %c0_4 = arith.constant 0 : index
    %c0_5 = arith.constant 0 : index
    %4 = vector.load %arg3[%c0_4, %c0_5] : memref<1x128xf32, #tpu.memory_space<vmem>>, vector<1x128xf32>
    %5 = vector.broadcast %4 : vector<1x128xf32> to vector<8x128xf32>
    %6 = arith.addf %3, %5 : vector<8x128xf32>
    %cst_6 = arith.constant 0.000000e+00 : bf16
    %7 = vector.broadcast %cst_6 : bf16 to vector<1x4x128xbf16>
    %c0_7 = arith.constant 0 : index
    %c0_8 = arith.constant 0 : index
    %c0_9 = arith.constant 0 : index
    %8 = vector.load %arg7[%c0_7, %c0_8, %c0_9] : memref<1x12x128xbf16, #tpu.memory_space<vmem>>, vector<1x4x128xbf16>
    tpu.vector_store %arg7[%c0_7, %c0_8, %c0_9], %7 {strides = array<i32>} : memref<1x12x128xbf16, #tpu.memory_space<vmem>>, vector<1x4x128xbf16>,
    %9 = arith.truncf %6 : vector<8x128xf32> to vector<8x128xbf16>
    %10 = vector.shape_cast %9 : vector<8x128xbf16> to vector<1x8x128xbf16>
    %c0_10 = arith.constant 0 : index
    %c4 = arith.constant 4 : index
    %c0_11 = arith.constant 0 : index
    %11 = vector.load %arg7[%c0_10, %c4, %c0_11] : memref<1x12x128xbf16, #tpu.memory_space<vmem>>, vector<1x8x128xbf16>
    tpu.vector_store %arg7[%c0_10, %c4, %c0_11], %10 {strides = array<i32>} : memref<1x12x128xbf16, #tpu.memory_space<vmem>>, vector<1x8x128xbf16>,
    %cst_12 = arith.constant 0.000000e+00 : f32
    %12 = vector.broadcast %cst_12 : f32 to vector<8x128xf32>
    %c0_13 = arith.constant 0 : index
    %c0_14 = arith.constant 0 : index
    %c0_15 = arith.constant 0 : index
    %13 = vector.load %arg7[%c0_13, %c0_14, %c0_15] : memref<1x12x128xbf16, #tpu.memory_space<vmem>>, vector<1x8x128xbf16>
    %14 = vector.shape_cast %13 : vector<1x8x128xbf16> to vector<8x128xbf16>
    %c0_16 = arith.constant 0 : index
    %c0_17 = arith.constant 0 : index
    %c0_18 = arith.constant 0 : index
    %15 = vector.load %arg4[%c0_16, %c0_17, %c0_18] : memref<5x128x128xbf16, #tpu.memory_space<vmem>>, vector<1x128x128xbf16>
    %16 = vector.shape_cast %15 : vector<1x128x128xbf16> to vector<128x128xbf16>
    %cst_19 = arith.constant dense<0.000000e+00> : vector<8x128xf32>
    %17 = tpu.matmul %14, %16, %cst_19 {dimension_numbers = #tpu.dot_dimension_numbers<[1], [0], [0], [1], [0, 0, 1, 1], [], []>} : vector<8x128xbf16>, vector<128x128xbf16>, vector<8x128xf32> -> vector<8x128xf32>
    %18 = arith.addf %12, %17 : vector<8x128xf32>
    %c0_20 = arith.constant 0 : index
    %c1 = arith.constant 1 : index
    %c0_21 = arith.constant 0 : index
    %19 = vector.load %arg7[%c0_20, %c1, %c0_21] : memref<1x12x128xbf16, #tpu.memory_space<vmem>>, vector<1x8x128xbf16>
    %20 = vector.shape_cast %19 : vector<1x8x128xbf16> to vector<8x128xbf16>
    %c1_22 = arith.constant 1 : index
    %c0_23 = arith.constant 0 : index
    %c0_24 = arith.constant 0 : index
    %21 = vector.load %arg4[%c1_22, %c0_23, %c0_24] : memref<5x128x128xbf16, #tpu.memory_space<vmem>>, vector<1x128x128xbf16>
    %22 = vector.shape_cast %21 : vector<1x128x128xbf16> to vector<128x128xbf16>
    %cst_25 = arith.constant dense<0.000000e+00> : vector<8x128xf32>
    %23 = tpu.matmul %20, %22, %cst_25 {dimension_numbers = #tpu.dot_dimension_numbers<[1], [0], [0], [1], [0, 0, 1, 1], [], []>} : vector<8x128xbf16>, vector<128x128xbf16>, vector<8x128xf32> -> vector<8x128xf32>
    %24 = arith.addf %18, %23 : vector<8x128xf32>
    %c0_26 = arith.constant 0 : index
    %c2 = arith.constant 2 : index
    %c0_27 = arith.constant 0 : index
    %25 = vector.load %arg7[%c0_26, %c2, %c0_27] : memref<1x12x128xbf16, #tpu.memory_space<vmem>>, vector<1x8x128xbf16>
    %26 = vector.shape_cast %25 : vector<1x8x128xbf16> to vector<8x128xbf16>
    %c2_28 = arith.constant 2 : index
    %c0_29 = arith.constant 0 : index
    %c0_30 = arith.constant 0 : index
    %27 = vector.load %arg4[%c2_28, %c0_29, %c0_30] : memref<5x128x128xbf16, #tpu.memory_space<vmem>>, vector<1x128x128xbf16>
    %28 = vector.shape_cast %27 : vector<1x128x128xbf16> to vector<128x128xbf16>
    %cst_31 = arith.constant dense<0.000000e+00> : vector<8x128xf32>
    %29 = tpu.matmul %26, %28, %cst_31 {dimension_numbers = #tpu.dot_dimension_numbers<[1], [0], [0], [1], [0, 0, 1, 1], [], []>} : vector<8x128xbf16>, vector<128x128xbf16>, vector<8x128xf32> -> vector<8x128xf32>
    %30 = arith.addf %24, %29 : vector<8x128xf32>
    %c0_32 = arith.constant 0 : index
    %c3 = arith.constant 3 : index
    %c0_33 = arith.constant 0 : index
    %31 = vector.load %arg7[%c0_32, %c3, %c0_33] : memref<1x12x128xbf16, #tpu.memory_space<vmem>>, vector<1x8x128xbf16>
    %32 = vector.shape_cast %31 : vector<1x8x128xbf16> to vector<8x128xbf16>
    %c3_34 = arith.constant 3 : index
    %c0_35 = arith.constant 0 : index
    %c0_36 = arith.constant 0 : index
    %33 = vector.load %arg4[%c3_34, %c0_35, %c0_36] : memref<5x128x128xbf16, #tpu.memory_space<vmem>>, vector<1x128x128xbf16>
    %34 = vector.shape_cast %33 : vector<1x128x128xbf16> to vector<128x128xbf16>
    %cst_37 = arith.constant dense<0.000000e+00> : vector<8x128xf32>
    %35 = tpu.matmul %32, %34, %cst_37 {dimension_numbers = #tpu.dot_dimension_numbers<[1], [0], [0], [1], [0, 0, 1, 1], [], []>} : vector<8x128xbf16>, vector<128x128xbf16>, vector<8x128xf32> -> vector<8x128xf32>
    %36 = arith.addf %30, %35 : vector<8x128xf32>
    %c0_38 = arith.constant 0 : index
    %c4_39 = arith.constant 4 : index
    %c0_40 = arith.constant 0 : index
    %37 = vector.load %arg7[%c0_38, %c4_39, %c0_40] : memref<1x12x128xbf16, #tpu.memory_space<vmem>>, vector<1x8x128xbf16>
    %38 = vector.shape_cast %37 : vector<1x8x128xbf16> to vector<8x128xbf16>
    %c4_41 = arith.constant 4 : index
    %c0_42 = arith.constant 0 : index
    %c0_43 = arith.constant 0 : index
    %39 = vector.load %arg4[%c4_41, %c0_42, %c0_43] : memref<5x128x128xbf16, #tpu.memory_space<vmem>>, vector<1x128x128xbf16>
    %40 = vector.shape_cast %39 : vector<1x128x128xbf16> to vector<128x128xbf16>
    %cst_44 = arith.constant dense<0.000000e+00> : vector<8x128xf32>
    %41 = tpu.matmul %38, %40, %cst_44 {dimension_numbers = #tpu.dot_dimension_numbers<[1], [0], [0], [1], [0, 0, 1, 1], [], []>} : vector<8x128xbf16>, vector<128x128xbf16>, vector<8x128xf32> -> vector<8x128xf32>
    %42 = arith.addf %36, %41 : vector<8x128xf32>
    %c0_45 = arith.constant 0 : index
    %c0_46 = arith.constant 0 : index
    %43 = vector.load %arg5[%c0_45, %c0_46] : memref<1x128xf32, #tpu.memory_space<vmem>>, vector<1x128xf32>
    %44 = vector.broadcast %43 : vector<1x128xf32> to vector<8x128xf32>
    %45 = arith.addf %42, %44 : vector<8x128xf32>
    %cst_47 = arith.constant 0.000000e+00 : f32
    %46 = vector.broadcast %cst_47 : f32 to vector<8x128xf32>
    %47 = arith.maximumf %45, %46 : vector<8x128xf32>
    %48 = vector.shape_cast %47 : vector<8x128xf32> to vector<1x8x128xf32>
    %c0_48 = arith.constant 0 : index
    %c0_49 = arith.constant 0 : index
    %c0_50 = arith.constant 0 : index
    %49 = vector.load %arg6[%c0_48, %c0_49, %c0_50] : memref<1x8x128xf32, #tpu.memory_space<vmem>>, vector<1x8x128xf32>
    tpu.vector_store %arg6[%c0_48, %c0_49, %c0_50], %48 {strides = array<i32>} : memref<1x8x128xf32, #tpu.memory_space<vmem>>, vector<1x8x128xf32>,
    return
  }
  func.func @transform_0(%arg0: i32) -> (i32, i32, i32) {
    %c0_i32 = arith.constant 0 : i32
    %c0_i32_0 = arith.constant 0 : i32
    %c0_i32_1 = arith.constant 0 : i32
    return %arg0, %c0_i32, %c0_i32_0 : i32, i32, i32
  }
  func.func @transform_1(%arg0: i32) -> (i32, i32) {
    %c0_i32 = arith.constant 0 : i32
    %c0_i32_0 = arith.constant 0 : i32
    %c0_i32_1 = arith.constant 0 : i32
    return %c0_i32, %c0_i32_0 : i32, i32
  }
  func.func @transform_2(%arg0: i32) -> (i32, i32) {
    %c0_i32 = arith.constant 0 : i32
    %c0_i32_0 = arith.constant 0 : i32
    %c0_i32_1 = arith.constant 0 : i32
    return %c0_i32, %c0_i32_0 : i32, i32
  }
  func.func @transform_3(%arg0: i32) -> (i32, i32, i32) {
    %c0_i32 = arith.constant 0 : i32
    %c0_i32_0 = arith.constant 0 : i32
    %c0_i32_1 = arith.constant 0 : i32
    %c0_i32_2 = arith.constant 0 : i32
    return %c0_i32, %c0_i32_0, %c0_i32_1 : i32, i32, i32
  }
  func.func @transform_4(%arg0: i32) -> (i32, i32) {
    %c0_i32 = arith.constant 0 : i32
    %c0_i32_0 = arith.constant 0 : i32
    %c0_i32_1 = arith.constant 0 : i32
    return %c0_i32, %c0_i32_0 : i32, i32
  }
  func.func @transform_5(%arg0: i32) -> (i32, i32, i32) {
    %c0_i32 = arith.constant 0 : i32
    %c0_i32_0 = arith.constant 0 : i32
    %c0_i32_1 = arith.constant 0 : i32
    return %arg0, %c0_i32, %c0_i32_0 : i32, i32, i32
  }
}

module attributes {stable_mosaic.version = 11 : i64} {
  func.func @_ncnn_kernel_transfer(%arg0: i32, %arg1: memref<1x8x16xbf16, #tpu.memory_space<vmem>>, %arg2: memref<16x128xbf16, #tpu.memory_space<vmem>>, %arg3: memref<1x128xf32, #tpu.memory_space<vmem>>, %arg4: memref<5x128x128xbf16, #tpu.memory_space<vmem>>, %arg5: memref<1x128xf32, #tpu.memory_space<vmem>>, %arg6: memref<1x8x128xf32, #tpu.memory_space<vmem>>, %arg7: memref<1x12x128xbf16, #tpu.memory_space<vmem>>) attributes {dimension_semantics = [#tpu.dimension_semantics<parallel>], iteration_bounds = array<i64: 2>, scalar_prefetch = 0 : i64, scratch_operands = 1 : i64, tpu.core_type = #tpu.core_type<tc>, window_params = [{transform_indices = @transform_0, window_bounds = array<i64: 1, 8, 16>}, {pipeline_mode = #tpu.pipeline_mode<synchronous>, transform_indices = @transform_1, window_bounds = array<i64: 16, 128>}, {pipeline_mode = #tpu.pipeline_mode<synchronous>, transform_indices = @transform_2, window_bounds = array<i64: 1, 128>}, {pipeline_mode = #tpu.pipeline_mode<synchronous>, transform_indices = @transform_3, window_bounds = array<i64: 5, 128, 128>}, {pipeline_mode = #tpu.pipeline_mode<synchronous>, transform_indices = @transform_4, window_bounds = array<i64: 1, 128>}, {transform_indices = @transform_5, window_bounds = array<i64: 1, 8, 128>}]} {
    %c0 = arith.constant 0 : index
    %c0_0 = arith.constant 0 : index
    %c0_1 = arith.constant 0 : index
    %0 = vector.load %arg1[%c0, %c0_0, %c0_1] : memref<1x8x16xbf16, #tpu.memory_space<vmem>>, vector<1x8x16xbf16>
    %1 = vector.shape_cast %0 : vector<1x8x16xbf16> to vector<8x16xbf16>
    %c0_2 = arith.constant 0 : index
    %c0_3 = arith.constant 0 : index
    %2 = vector.load %arg2[%c0_2, %c0_3] : memref<16x128xbf16, #tpu.memory_space<vmem>>, vector<16x128xbf16>
    %cst = arith.constant dense<0.000000e+00> : vector<8x128xf32>
    %3 = tpu.matmul %1, %2, %cst {dimension_numbers = #tpu.dot_dimension_numbers<[1], [0], [0], [1], [0, 0, 1, 1], [], []>} : vector<8x16xbf16>, vector<16x128xbf16>, vector<8x128xf32> -> vector<8x128xf32>
    %c0_4 = arith.constant 0 : index
    %c0_5 = arith.constant 0 : index
    %4 = vector.load %arg3[%c0_4, %c0_5] : memref<1x128xf32, #tpu.memory_space<vmem>>, vector<1x128xf32>
    %5 = vector.broadcast %4 : vector<1x128xf32> to vector<8x128xf32>
    %6 = arith.addf %3, %5 : vector<8x128xf32>
    %cst_6 = arith.constant 0.000000e+00 : bf16
    %7 = vector.broadcast %cst_6 : bf16 to vector<1x4x128xbf16>
    %c0_7 = arith.constant 0 : index
    %c0_8 = arith.constant 0 : index
    %c0_9 = arith.constant 0 : index
    %8 = vector.load %arg7[%c0_7, %c0_8, %c0_9] : memref<1x12x128xbf16, #tpu.memory_space<vmem>>, vector<1x4x128xbf16>
    tpu.vector_store %arg7[%c0_7, %c0_8, %c0_9], %7 {strides = array<i32>} : memref<1x12x128xbf16, #tpu.memory_space<vmem>>, vector<1x4x128xbf16>,
    %9 = arith.truncf %6 : vector<8x128xf32> to vector<8x128xbf16>
    %10 = vector.shape_cast %9 : vector<8x128xbf16> to vector<1x8x128xbf16>
    %c0_10 = arith.constant 0 : index
    %c4 = arith.constant 4 : index
    %c0_11 = arith.constant 0 : index
    %11 = vector.load %arg7[%c0_10, %c4, %c0_11] : memref<1x12x128xbf16, #tpu.memory_space<vmem>>, vector<1x8x128xbf16>
    tpu.vector_store %arg7[%c0_10, %c4, %c0_11], %10 {strides = array<i32>} : memref<1x12x128xbf16, #tpu.memory_space<vmem>>, vector<1x8x128xbf16>,
    %cst_12 = arith.constant 0.000000e+00 : f32
    %12 = vector.broadcast %cst_12 : f32 to vector<8x128xf32>
    %c0_13 = arith.constant 0 : index
    %c0_14 = arith.constant 0 : index
    %c0_15 = arith.constant 0 : index
    %13 = vector.load %arg7[%c0_13, %c0_14, %c0_15] : memref<1x12x128xbf16, #tpu.memory_space<vmem>>, vector<1x8x128xbf16>
    %14 = vector.shape_cast %13 : vector<1x8x128xbf16> to vector<8x128xbf16>
    %c0_16 = arith.constant 0 : index
    %c0_17 = arith.constant 0 : index
    %c0_18 = arith.constant 0 : index
    %15 = vector.load %arg4[%c0_16, %c0_17, %c0_18] : memref<5x128x128xbf16, #tpu.memory_space<vmem>>, vector<1x128x128xbf16>
    %16 = vector.shape_cast %15 : vector<1x128x128xbf16> to vector<128x128xbf16>
    %cst_19 = arith.constant dense<0.000000e+00> : vector<8x128xf32>
    %17 = tpu.matmul %14, %16, %cst_19 {dimension_numbers = #tpu.dot_dimension_numbers<[1], [0], [0], [1], [0, 0, 1, 1], [], []>} : vector<8x128xbf16>, vector<128x128xbf16>, vector<8x128xf32> -> vector<8x128xf32>
    %18 = arith.addf %12, %17 : vector<8x128xf32>
    %c0_20 = arith.constant 0 : index
    %c1 = arith.constant 1 : index
    %c0_21 = arith.constant 0 : index
    %19 = vector.load %arg7[%c0_20, %c1, %c0_21] : memref<1x12x128xbf16, #tpu.memory_space<vmem>>, vector<1x8x128xbf16>
    %20 = vector.shape_cast %19 : vector<1x8x128xbf16> to vector<8x128xbf16>
    %c1_22 = arith.constant 1 : index
    %c0_23 = arith.constant 0 : index
    %c0_24 = arith.constant 0 : index
    %21 = vector.load %arg4[%c1_22, %c0_23, %c0_24] : memref<5x128x128xbf16, #tpu.memory_space<vmem>>, vector<1x128x128xbf16>
    %22 = vector.shape_cast %21 : vector<1x128x128xbf16> to vector<128x128xbf16>
    %cst_25 = arith.constant dense<0.000000e+00> : vector<8x128xf32>
    %23 = tpu.matmul %20, %22, %cst_25 {dimension_numbers = #tpu.dot_dimension_numbers<[1], [0], [0], [1], [0, 0, 1, 1], [], []>} : vector<8x128xbf16>, vector<128x128xbf16>, vector<8x128xf32> -> vector<8x128xf32>
    %24 = arith.addf %18, %23 : vector<8x128xf32>
    %c0_26 = arith.constant 0 : index
    %c2 = arith.constant 2 : index
    %c0_27 = arith.constant 0 : index
    %25 = vector.load %arg7[%c0_26, %c2, %c0_27] : memref<1x12x128xbf16, #tpu.memory_space<vmem>>, vector<1x8x128xbf16>
    %26 = vector.shape_cast %25 : vector<1x8x128xbf16> to vector<8x128xbf16>
    %c2_28 = arith.constant 2 : index
    %c0_29 = arith.constant 0 : index
    %c0_30 = arith.constant 0 : index
    %27 = vector.load %arg4[%c2_28, %c0_29, %c0_30] : memref<5x128x128xbf16, #tpu.memory_space<vmem>>, vector<1x128x128xbf16>
    %28 = vector.shape_cast %27 : vector<1x128x128xbf16> to vector<128x128xbf16>
    %cst_31 = arith.constant dense<0.000000e+00> : vector<8x128xf32>
    %29 = tpu.matmul %26, %28, %cst_31 {dimension_numbers = #tpu.dot_dimension_numbers<[1], [0], [0], [1], [0, 0, 1, 1], [], []>} : vector<8x128xbf16>, vector<128x128xbf16>, vector<8x128xf32> -> vector<8x128xf32>
    %30 = arith.addf %24, %29 : vector<8x128xf32>
    %c0_32 = arith.constant 0 : index
    %c3 = arith.constant 3 : index
    %c0_33 = arith.constant 0 : index
    %31 = vector.load %arg7[%c0_32, %c3, %c0_33] : memref<1x12x128xbf16, #tpu.memory_space<vmem>>, vector<1x8x128xbf16>
    %32 = vector.shape_cast %31 : vector<1x8x128xbf16> to vector<8x128xbf16>
    %c3_34 = arith.constant 3 : index
    %c0_35 = arith.constant 0 : index
    %c0_36 = arith.constant 0 : index
    %33 = vector.load %arg4[%c3_34, %c0_35, %c0_36] : memref<5x128x128xbf16, #tpu.memory_space<vmem>>, vector<1x128x128xbf16>
    %34 = vector.shape_cast %33 : vector<1x128x128xbf16> to vector<128x128xbf16>
    %cst_37 = arith.constant dense<0.000000e+00> : vector<8x128xf32>
    %35 = tpu.matmul %32, %34, %cst_37 {dimension_numbers = #tpu.dot_dimension_numbers<[1], [0], [0], [1], [0, 0, 1, 1], [], []>} : vector<8x128xbf16>, vector<128x128xbf16>, vector<8x128xf32> -> vector<8x128xf32>
    %36 = arith.addf %30, %35 : vector<8x128xf32>
    %c0_38 = arith.constant 0 : index
    %c4_39 = arith.constant 4 : index
    %c0_40 = arith.constant 0 : index
    %37 = vector.load %arg7[%c0_38, %c4_39, %c0_40] : memref<1x12x128xbf16, #tpu.memory_space<vmem>>, vector<1x8x128xbf16>
    %38 = vector.shape_cast %37 : vector<1x8x128xbf16> to vector<8x128xbf16>
    %c4_41 = arith.constant 4 : index
    %c0_42 = arith.constant 0 : index
    %c0_43 = arith.constant 0 : index
    %39 = vector.load %arg4[%c4_41, %c0_42, %c0_43] : memref<5x128x128xbf16, #tpu.memory_space<vmem>>, vector<1x128x128xbf16>
    %40 = vector.shape_cast %39 : vector<1x128x128xbf16> to vector<128x128xbf16>
    %cst_44 = arith.constant dense<0.000000e+00> : vector<8x128xf32>
    %41 = tpu.matmul %38, %40, %cst_44 {dimension_numbers = #tpu.dot_dimension_numbers<[1], [0], [0], [1], [0, 0, 1, 1], [], []>} : vector<8x128xbf16>, vector<128x128xbf16>, vector<8x128xf32> -> vector<8x128xf32>
    %42 = arith.addf %36, %41 : vector<8x128xf32>
    %c0_45 = arith.constant 0 : index
    %c0_46 = arith.constant 0 : index
    %43 = vector.load %arg5[%c0_45, %c0_46] : memref<1x128xf32, #tpu.memory_space<vmem>>, vector<1x128xf32>
    %44 = vector.broadcast %43 : vector<1x128xf32> to vector<8x128xf32>
    %45 = arith.addf %42, %44 : vector<8x128xf32>
    %cst_47 = arith.constant 0.000000e+00 : f32
    %46 = vector.broadcast %cst_47 : f32 to vector<8x128xf32>
    %47 = arith.maximumf %45, %46 : vector<8x128xf32>
    %48 = vector.shape_cast %47 : vector<8x128xf32> to vector<1x8x128xf32>
    %c0_48 = arith.constant 0 : index
    %c0_49 = arith.constant 0 : index
    %c0_50 = arith.constant 0 : index
    %49 = vector.load %arg6[%c0_48, %c0_49, %c0_50] : memref<1x8x128xf32, #tpu.memory_space<vmem>>, vector<1x8x128xf32>
    tpu.vector_store %arg6[%c0_48, %c0_49, %c0_50], %48 {strides = array<i32>} : memref<1x8x128xf32, #tpu.memory_space<vmem>>, vector<1x8x128xf32>,
    return
  }
  func.func @transform_0(%arg0: i32) -> (i32, i32, i32) {
    %c0_i32 = arith.constant 0 : i32
    %c0_i32_0 = arith.constant 0 : i32
    %c0_i32_1 = arith.constant 0 : i32
    return %arg0, %c0_i32, %c0_i32_0 : i32, i32, i32
  }
  func.func @transform_1(%arg0: i32) -> (i32, i32) {
    %c0_i32 = arith.constant 0 : i32
    %c0_i32_0 = arith.constant 0 : i32
    %c0_i32_1 = arith.constant 0 : i32
    return %c0_i32, %c0_i32_0 : i32, i32
  }
  func.func @transform_2(%arg0: i32) -> (i32, i32) {
    %c0_i32 = arith.constant 0 : i32
    %c0_i32_0 = arith.constant 0 : i32
    %c0_i32_1 = arith.constant 0 : i32
    return %c0_i32, %c0_i32_0 : i32, i32
  }
  func.func @transform_3(%arg0: i32) -> (i32, i32, i32) {
    %c0_i32 = arith.constant 0 : i32
    %c0_i32_0 = arith.constant 0 : i32
    %c0_i32_1 = arith.constant 0 : i32
    %c0_i32_2 = arith.constant 0 : i32
    return %c0_i32, %c0_i32_0, %c0_i32_1 : i32, i32, i32
  }
  func.func @transform_4(%arg0: i32) -> (i32, i32) {
    %c0_i32 = arith.constant 0 : i32
    %c0_i32_0 = arith.constant 0 : i32
    %c0_i32_1 = arith.constant 0 : i32
    return %c0_i32, %c0_i32_0 : i32, i32
  }
  func.func @transform_5(%arg0: i32) -> (i32, i32, i32) {
    %c0_i32 = arith.constant 0 : i32
    %c0_i32_0 = arith.constant 0 : i32
    %c0_i32_1 = arith.constant 0 : i32
    return %arg0, %c0_i32, %c0_i32_0 : i32, i32, i32
  }
}

</mosaic_0001>

<llo_original>
// kernel: tpu_custom_call.1
$region0: #{tpu_custom_call.1}
  #allocation0 [shape = 'u32[]', space=smem, size = 0x4, offset = 0x4, fixed_abs, tag = 'smem constant byte address 0x4 - core index']
  #allocation1 [shape = 'u32[144,128]{1,0:T(1,128)}', space=vmem, size = 0x12000, scoped, tag = 'internal scratch']
  #allocation2 [shape = 'bf16[1,12,128]{2,1,0:T(8,128)(2,1)}', space=vmem, size = 0x1000, scoped, tag = 'scratch operand']
  %s0 = inlined_call_operand.hbm [shape: bf16[2,8,16], index: 0, kind: input, shape index: {}]
  %s1 = inlined_call_operand.hbm [shape: bf16[16,128], index: 1, kind: input, shape index: {}]
  %s2 = inlined_call_operand.vmem [shape: f32[1,128], index: 2, kind: input, shape index: {}]
  %s3 = inlined_call_operand.hbm [shape: bf16[5,128,128], index: 3, kind: input, shape index: {}]
  %s4 = inlined_call_operand.vmem [shape: f32[1,128], index: 4, kind: input, shape index: {}]
  %s5 = inlined_call_operand.hbm [shape: f32[2,8,128], index: 5, kind: output, shape index: {}]
  %s6 = sld [smem:[#allocation0]]
  $region65: #{tpu_custom_call.1} parent=0
    _
  %s8 = ssub.s32 1, %s6
  %s9 = scalar_select 0, %s8, %s6
  $region1: #{tpu_custom_call.1} parent=0
    #allocation3 [shape = 'u8[4096]{0}', space=vmem, size = 0x1000, scoped, tag = 'input window, operand 0']
    #allocation4 [shape = 's32[2]{0}', space=sflag, size = 0x8, scoped, tag = 'scoped memory for tpu_custom_call.1']
    #allocation5 [shape = 's32[2]{0}', space=sflag, size = 0x8, scoped, tag = 'scoped memory for tpu_custom_call.1']
    #allocation6 [shape = 'u8[4096]{0}', space=vmem, size = 0x1000, scoped, tag = 'input window, operand 1, single buffered']
    #allocation7 [shape = 's32[1]{0}', space=sflag, size = 0x4, scoped, tag = 'scoped memory for tpu_custom_call.1']
    #allocation8 [shape = 'u8[163840]{0}', space=vmem, size = 0x28000, scoped, tag = 'input window, operand 3, single buffered']
    #allocation9 [shape = 'u8[8192]{0}', space=vmem, size = 0x2000, scoped, tag = 'output window, operand 0']
    %10 = vsyncpa [#allocation4], 0
    %s11 = scalar_lea.sflag [#allocation4], 1
    %12 = vsyncpa %s11, 0
    %13 = vsyncpa [#allocation7], 0
    %14 = vsyncpa [#allocation5], 0
    %s15 = scalar_lea.sflag [#allocation5], 1
    %16 = vsyncpa %s15, 0
    loop: start=0, step=1, limit=4
    $region2: #{tpu_custom_call.1} parent=1 // loop_pre_header
      _
    $region3: #{tpu_custom_call.1} parent=1 // loop_header
      %s18 = sphi 0, %s22
      %p19 = scmp.ge.s32.totalorder %s18, 4
      %s28 = sphi 0, %s30
      %s31 = sphi 0, %s28
      %s32 = sphi 0, %s31
      %s48 = sphi 0, %s32
      %s52 = sphi 0, %s52
      %s54 = sphi 0, %s52
      %s55 = sphi 0, %s54
      %s69 = sphi 0, %s55
      %s73 = sphi 0, %s73
      %s75 = sphi 0, %s73
      %s76 = sphi 0, %s75
      %s90 = sphi 0, %s76
      %s94 = sphi 0, %s94
      %s96 = sphi 0, %s94
      %s97 = sphi 0, %s96
      %s111 = sphi 0, %s97
      %s115 = sphi 0, %s115
      %s117 = sphi 0, %s115
      %s118 = sphi 0, %s117
      %s132 = sphi 0, %s118
      %s138 = sphi 0, %s140
      %s141 = sphi 0, %s138
      %s142 = sphi 0, %s141
      %s158 = sphi 0, %s142
    $region4: #{tpu_custom_call.1} parent=1 // loop_header_branch
      %21 = sbr.rel (%p19) target = $region8
    $region5: #{tpu_custom_call.1} parent=1 // loop_body
      %s23 = ssub.s32 %s18, 1
      %s24 = ssub.s32 %s18, 2
      %s25 = sadd.s32 %s18, 1
      %s26 = ssub.s32 %s18, %s25
      %p27 = scmp.eq.s32.totalorder %s26, 0
      %s29 = sadd.s32 %s28, 1
      %s30 = scalar_select %p27, %s28, %s29
      %p33 = pneg %p27
      %p34 = scmp.eq.s32.totalorder %s18, 1
      %p35 = por %p33, %p34
      %p36 = scmp.ne.s32.totalorder %s28, %s31
      %p37 = scmp.eq.s32.totalorder %s18, 0
      %p38 = por %p36, %p37
      %p39 = scmp.ne.s32.totalorder %s28, %s31
      %p40 = scmp.eq.s32.totalorder %s23, 1
      %p41 = por %p39, %p40
      %p42 = scmp.ne.s32.totalorder %s31, %s32
      %p43 = scmp.eq.s32.totalorder %s23, 0
      %p44 = por %p42, %p43
      %p45 = scmp.ne.s32.totalorder %s31, %s32
      %p46 = scmp.eq.s32.totalorder %s24, 1
      %p47 = por %p45, %p46
      %p49 = scmp.ne.s32.totalorder %s32, %s48
      %p50 = scmp.eq.s32.totalorder %s24, 0
      %p51 = por %p49, %p50
      %s53 = sadd.s32 %s52, 1
      %p56 = scmp.eq.s32.totalorder %s18, 1
      %p57 = scmp.ne.s32.totalorder %s52, %s54
      %p58 = scmp.eq.s32.totalorder %s18, 0
      %p59 = por %p57, %p58
      %p60 = scmp.ne.s32.totalorder %s52, %s54
      %p61 = scmp.eq.s32.totalorder %s23, 1
      %p62 = por %p60, %p61
      %p63 = scmp.ne.s32.totalorder %s54, %s55
      %p64 = scmp.eq.s32.totalorder %s23, 0
      %p65 = por %p63, %p64
      %p66 = scmp.ne.s32.totalorder %s54, %s55
      %p67 = scmp.eq.s32.totalorder %s24, 1
      %p68 = por %p66, %p67
      %p70 = scmp.ne.s32.totalorder %s55, %s69
      %p71 = scmp.eq.s32.totalorder %s24, 0
      %p72 = por %p70, %p71
      %s74 = sadd.s32 %s73, 1
      %p77 = scmp.eq.s32.totalorder %s18, 1
      %p78 = scmp.ne.s32.totalorder %s73, %s75
      %p79 = scmp.eq.s32.totalorder %s18, 0
      %p80 = por %p78, %p79
      %p81 = scmp.ne.s32.totalorder %s73, %s75
      %p82 = scmp.eq.s32.totalorder %s23, 1
      %p83 = por %p81, %p82
      %p84 = scmp.ne.s32.totalorder %s75, %s76
      %p85 = scmp.eq.s32.totalorder %s23, 0
      %p86 = por %p84, %p85
      %p87 = scmp.ne.s32.totalorder %s75, %s76
      %p88 = scmp.eq.s32.totalorder %s24, 1
      %p89 = por %p87, %p88
      %p91 = scmp.ne.s32.totalorder %s76, %s90
      %p92 = scmp.eq.s32.totalorder %s24, 0
      %p93 = por %p91, %p92
      %s95 = sadd.s32 %s94, 1
      %p98 = scmp.eq.s32.totalorder %s18, 1
      %p99 = scmp.ne.s32.totalorder %s94, %s96
      %p100 = scmp.eq.s32.totalorder %s18, 0
      %p101 = por %p99, %p100
      %p102 = scmp.ne.s32.totalorder %s94, %s96
      %p103 = scmp.eq.s32.totalorder %s23, 1
      %p104 = por %p102, %p103
      %p105 = scmp.ne.s32.totalorder %s96, %s97
      %p106 = scmp.eq.s32.totalorder %s23, 0
      %p107 = por %p105, %p106
      %p108 = scmp.ne.s32.totalorder %s96, %s97
      %p109 = scmp.eq.s32.totalorder %s24, 1
      %p110 = por %p108, %p109
      %p112 = scmp.ne.s32.totalorder %s97, %s111
      %p113 = scmp.eq.s32.totalorder %s24, 0
      %p114 = por %p112, %p113
      %s116 = sadd.s32 %s115, 1
      %p119 = scmp.eq.s32.totalorder %s18, 1
      %p120 = scmp.ne.s32.totalorder %s115, %s117
      %p121 = scmp.eq.s32.totalorder %s18, 0
      %p122 = por %p120, %p121
      %p123 = scmp.ne.s32.totalorder %s115, %s117
      %p124 = scmp.eq.s32.totalorder %s23, 1
      %p125 = por %p123, %p124
      %p126 = scmp.ne.s32.totalorder %s117, %s118
      %p127 = scmp.eq.s32.totalorder %s23, 0
      %p128 = por %p126, %p127
      %p129 = scmp.ne.s32.totalorder %s117, %s118
      %p130 = scmp.eq.s32.totalorder %s24, 1
      %p131 = por %p129, %p130
      %p133 = scmp.ne.s32.totalorder %s118, %s132
      %p134 = scmp.eq.s32.totalorder %s24, 0
      %p135 = por %p133, %p134
      %s136 = ssub.s32 %s18, %s25
      %p137 = scmp.eq.s32.totalorder %s136, 0
      %s139 = sadd.s32 %s138, 1
      %s140 = scalar_select %p137, %s138, %s139
      %p143 = pneg %p137
      %p144 = scmp.eq.s32.totalorder %s18, 1
      %p145 = por %p143, %p144
      %p146 = scmp.ne.s32.totalorder %s138, %s141
      %p147 = scmp.eq.s32.totalorder %s18, 0
      %p148 = por %p146, %p147
      %p149 = scmp.ne.s32.totalorder %s138, %s141
      %p150 = scmp.eq.s32.totalorder %s23, 1
      %p151 = por %p149, %p150
      %p152 = scmp.ne.s32.totalorder %s141, %s142
      %p153 = scmp.eq.s32.totalorder %s23, 0
      %p154 = por %p152, %p153
      %p155 = scmp.ne.s32.totalorder %s141, %s142
      %p156 = scmp.eq.s32.totalorder %s24, 1
      %p157 = por %p155, %p156
      %p159 = scmp.ne.s32.totalorder %s142, %s158
      %p160 = scmp.eq.s32.totalorder %s24, 0
      %p161 = por %p159, %p160
      %p162 = scmp.le.s32.totalorder 1, %s18
      %p163 = scmp.lt.s32.totalorder %s18, 3
      %p164 = pnand %p162, %p163
      %p165 = pneg %p164
      // Predicated region
      $region9: #{tpu_custom_call.1} parent=5 // pred_check
        _
      $region10: #{tpu_custom_call.1} parent=5 // pred_check_branch
        %167 = sbr.rel (%p164) target = $region12
      $region11: #{tpu_custom_call.1} parent=5 // pred_region
        %s168 = ssub.s32 %s18, 1
        // Predicated region
        $region13: #{tpu_custom_call.1} parent=11 // pred_check
          %p169 = pneg %p65
        $region14: #{tpu_custom_call.1} parent=11 // pred_check_branch
          %171 = sbr.rel (%p169) target = $region16
        $region15: #{tpu_custom_call.1} parent=11 // pred_region
          %s173 = ssub.s32 128, 128
          %174 = vsyncadd [#allocation7], %s173
          %s175 = sshll.u32 [#allocation6], 4
          %s176 = int_to_ptr.vmem [resolvable:$true] %s175
          %181 = dma.hbm_to_vmem [thread:$0]  %s1, 128, %s176, [#allocation7], 64, 64, 4
        $region16: #{tpu_custom_call.1} parent=11 // pred_fallthru
          _
        // Predicated region
        $region17: #{tpu_custom_call.1} parent=11 // pred_check
          %p182 = pneg %p86
        $region18: #{tpu_custom_call.1} parent=11 // pred_check_branch
          %184 = sbr.rel (%p182) target = $region20
        $region19: #{tpu_custom_call.1} parent=11 // pred_region
          _
        $region20: #{tpu_custom_call.1} parent=11 // pred_fallthru
          _
        // Predicated region
        $region21: #{tpu_custom_call.1} parent=11 // pred_check
          %p185 = pneg %p107
        $region22: #{tpu_custom_call.1} parent=11 // pred_check_branch
          %187 = sbr.rel (%p185) target = $region24
        $region23: #{tpu_custom_call.1} parent=11 // pred_region
          %s189 = ssub.s32 5120, 5120
          %190 = vsyncadd [#allocation7], %s189
          %s191 = sshll.u32 [#allocation8], 4
          %s192 = int_to_ptr.vmem [resolvable:$true] %s191
          %197 = dma.hbm_to_vmem [thread:$0]  %s3, 5120, %s192, [#allocation7], 64, 64, 4
        $region24: #{tpu_custom_call.1} parent=11 // pred_fallthru
          _
        // Predicated region
        $region25: #{tpu_custom_call.1} parent=11 // pred_check
          %p198 = pneg %p128
        $region26: #{tpu_custom_call.1} parent=11 // pred_check_branch
          %200 = sbr.rel (%p198) target = $region28
        $region27: #{tpu_custom_call.1} parent=11 // pred_region
          _
        $region28: #{tpu_custom_call.1} parent=11 // pred_fallthru
          _
      $region12: #{tpu_custom_call.1} parent=5 // pred_fallthru
        _
      %p201 = scmp.lt.s32.totalorder %s18, 2
      // Predicated region
      $region29: #{tpu_custom_call.1} parent=5 // pred_check
        %p202 = pneg %p201
      $region30: #{tpu_custom_call.1} parent=5 // pred_check_branch
        %204 = sbr.rel (%p202) target = $region32
      $region31: #{tpu_custom_call.1} parent=5 // pred_region
        // Predicated region
        $region33: #{tpu_custom_call.1} parent=31 // pred_check
          %p205 = pneg %p38
        $region34: #{tpu_custom_call.1} parent=31 // pred_check_branch
          %207 = sbr.rel (%p205) target = $region36
        $region35: #{tpu_custom_call.1} parent=31 // pred_region
          %s208 = sand.u32 %s28, 1
          %s209 = scalar_lea.sflag [#allocation4], %s208
          %s210 = sand.u32 %s28, 1
          %s211 = smul.addr %s210, 4
          %s212 = scalar_lea.vmem [#allocation3], %s211
          %s214 = ssub.s32 64, 64
          %215 = vsyncadd %s209, %s214
          %s216 = smul.addr %s18, 64
          %s217 = scalar_lea.hbm %s0, %s216
          %s219 = sshll.u32 %s212, 4
          %s220 = int_to_ptr.vmem [resolvable:$true] %s219
          %222 = dma.hbm_to_vmem [thread:$0]  %s217, 64, %s220, %s209
        $region36: #{tpu_custom_call.1} parent=31 // pred_fallthru
          _
      $region32: #{tpu_custom_call.1} parent=5 // pred_fallthru
        _
      %p223 = scmp.le.s32.totalorder 1, %s18
      %p224 = scmp.lt.s32.totalorder %s18, 3
      %p225 = pnand %p223, %p224
      %p226 = pneg %p225
      // Predicated region
      $region37: #{tpu_custom_call.1} parent=5 // pred_check
        _
      $region38: #{tpu_custom_call.1} parent=5 // pred_check_branch
        %228 = sbr.rel (%p225) target = $region40
      $region39: #{tpu_custom_call.1} parent=5 // pred_region
        %s229 = ssub.s32 %s18, 1
        %s230 = sand.u32 %s31, 1
        %s231 = scalar_lea.sflag [#allocation4], %s230
        %s232 = sand.u32 %s31, 1
        %s233 = smul.addr %s232, 4
        %s234 = scalar_lea.vmem [#allocation3], %s233
        // Predicated region
        $region41: #{tpu_custom_call.1} parent=39 // pred_check
          %p235 = pneg %p44
        $region42: #{tpu_custom_call.1} parent=39 // pred_check_branch
          %237 = sbr.rel (%p235) target = $region44
        $region43: #{tpu_custom_call.1} parent=39 // pred_region
          %238 = dma.done %s231, 64
        $region44: #{tpu_custom_call.1} parent=39 // pred_fallthru
          _
        // Predicated region
        $region45: #{tpu_custom_call.1} parent=39 // pred_check
          %p239 = pneg %p65
        $region46: #{tpu_custom_call.1} parent=39 // pred_check_branch
          %241 = sbr.rel (%p239) target = $region48
        $region47: #{tpu_custom_call.1} parent=39 // pred_region
          %242 = dma.done [#allocation7], 128
        $region48: #{tpu_custom_call.1} parent=39 // pred_fallthru
          _
        // Predicated region
        $region49: #{tpu_custom_call.1} parent=39 // pred_check
          %p243 = pneg %p107
        $region50: #{tpu_custom_call.1} parent=39 // pred_check_branch
          %245 = sbr.rel (%p243) target = $region52
        $region51: #{tpu_custom_call.1} parent=39 // pred_region
          %246 = dma.done [#allocation7], 5120
        $region52: #{tpu_custom_call.1} parent=39 // pred_fallthru
          _
        %s247 = sand.u32 %s31, 1
        %s248 = scalar_lea.sflag [#allocation4], %s247
        %s249 = sand.u32 %s31, 1
        %s250 = smul.addr %s249, 4
        %s251 = scalar_lea.vmem [#allocation3], %s250
        %p252 = pneg %p44
        %p253 = pneg %p41
        %p254 = pneg %p65
        %p255 = pneg %p62
        %p256 = pneg %p86
        %p257 = pneg %p83
        %p258 = pneg %p107
        %p259 = pneg %p104
        %p260 = pneg %p128
        %p261 = pneg %p125
        %p262 = pneg %p154
        %p263 = pneg %p151
        %s264 = sand.u32 %s141, 1
        %s265 = scalar_lea.sflag [#allocation5], %s264
        %s266 = sand.u32 %s141, 1
        %s267 = smul.addr %s266, 8
        %s268 = scalar_lea.vmem [#allocation9], %s267
        %v270 = vld [vmem:[%s234] sm:$0xf]
        %v271 = vld [vmem:[#allocation6] sm:$0xf]
        %v272 = vld [vmem:[#allocation6 + $0x4] sm:$0xf]
        %v273 = vld [vmem:[%s2] sm:$0x1]
        %v275 = vlaneseq
        %v276 = vshrl.u32 %v275, 7
        %v277 = vsub.s32 0, %v276
        %v278 = vrot.slane %v273, %v277
        %v282 = vunpack.c.l.b16 %v271
        %v283 = vunpack.c.l.b16 %v272
        %v284 = vpack.c.b16 %v283, %v282
        %vm286 = vcmask 130048
        %v288 = vsel %vm286, %v270, 0
        %290 = vmatprep.subr.bf16.mxu0 0
        %291 = vmatpush1.bf16.msra.mxu0 0
        %292 = vmatprep.subr.bf16.mxu0 0
        %293 = vmatpush1.bf16.msra.mxu0 0
        %294 = vmatprep.subr.bf16.mxu0 0
        %295 = vmatpush1.bf16.msra.mxu0 0
        %296 = vmatprep.subr.bf16.mxu0 0
        %297 = vmatpush1.bf16.msra.mxu0 0
        %298 = vmatprep.subr.bf16.mxu0 0
        %299 = vmatpush1.bf16.msra.mxu0 0
        %300 = vmatprep.subr.bf16.mxu0 0
        %301 = vmatpush1.bf16.msra.mxu0 0
        %302 = vmatprep.subr.bf16.mxu0 0
        %303 = vmatpush1.bf16.msra.mxu0 0
        %304 = vmatprep.subr.bf16.mxu0 0
        %305 = vmatpush1.bf16.msra.mxu0 %v284
        %306 = vmatprep.subr.bf16.mxu0 0
        %307 = vmatpush2.bf16.msra.mxu0 0
        %308 = vmatprep.subr.bf16.mxu0 0
        %309 = vmatpush2.bf16.msra.mxu0 0
        %310 = vmatprep.subr.bf16.mxu0 0
        %311 = vmatpush2.bf16.msra.mxu0 0
        %312 = vmatprep.subr.bf16.mxu0 0
        %313 = vmatpush2.bf16.msra.mxu0 0
        %314 = vmatprep.subr.bf16.mxu0 0
        %315 = vmatpush2.bf16.msra.mxu0 0
        %316 = vmatprep.subr.bf16.mxu0 0
        %317 = vmatpush2.bf16.msra.mxu0 0
        %318 = vmatprep.subr.bf16.mxu0 0
        %319 = vmatpush2.bf16.msra.mxu0 0
        %320 = vmatprep.subr.bf16.mxu0 0
        %321 = vmatpush2.bf16.msra.mxu0 0
        %322 = vmatprep.mubr.bf16.mxu0 0
        %323 = vmatmul.mubr.bf16.gmra.mxu0 %v288
        %v324 = vpop.f32.mrf.mxu0
        %v325 = vadd.f32 %v278, %v324
        %v326 = vpop.f32.mrf.mxu0
        %v327 = vpop.f32.mrf.mxu0
        %v328 = vpop.f32.mrf.mxu0
        %329 = vdwg.mxu0
        %330 = vst [vmem:[#allocation2] sm:$0x3] 0
        %v331 = vpack.c.bf16 %v325, %v325
        %v333 = vunpack.c.l.b16 %v331
        %v334 = vpack.c.b16 %v333, %v333
        %v335 = vrot.slane %v334, 6
        %v336 = vrot.slane %v335, 4
        %339 = vst [vmem:[#allocation2] sm:$0xc] %v335
        %340 = vst [vmem:[#allocation2 + $0x4] sm:$0x3] %v336
        %v341 = vld [vmem:[#allocation2] sm:$0xf]
        %v342 = vld [vmem:[#allocation8] sm:$0xf]
        %v343 = vld [vmem:[#allocation8 + $0x4] sm:$0xf]
        %v344 = vld [vmem:[#allocation8 + $0x8] sm:$0xf]
        %v345 = vld [vmem:[#allocation8 + $0xc] sm:$0xf]
        %v346 = vld [vmem:[#allocation8 + $0x10] sm:$0xf]
        %v347 = vld [vmem:[#allocation8 + $0x14] sm:$0xf]
        %v348 = vld [vmem:[#allocation8 + $0x18] sm:$0xf]
        %v349 = vld [vmem:[#allocation8 + $0x1c] sm:$0xf]
        %v350 = vld [vmem:[#allocation8 + $0x20] sm:$0xf]
        %v351 = vld [vmem:[#allocation8 + $0x24] sm:$0xf]
        %v352 = vld [vmem:[#allocation8 + $0x28] sm:$0xf]
        %v353 = vld [vmem:[#allocation8 + $0x2c] sm:$0xf]
        %v354 = vld [vmem:[#allocation8 + $0x30] sm:$0xf]
        %v355 = vld [vmem:[#allocation8 + $0x34] sm:$0xf]
        %v356 = vld [vmem:[#allocation8 + $0x38] sm:$0xf]
        %v357 = vld [vmem:[#allocation8 + $0x3c] sm:$0xf]
        %v358 = vld [vmem:[#allocation2 + $0x4] sm:$0x1]
        %s359 = scalar_lea.vmem [#allocation8], 64
        %v360 = vld [vmem:[%s359] sm:$0xf]
        %v361 = vld [vmem:[%s359 + $0x4] sm:$0xf]
        %v362 = vld [vmem:[%s359 + $0x8] sm:$0xf]
        %v363 = vld [vmem:[%s359 + $0xc] sm:$0xf]
        %v364 = vld [vmem:[%s359 + $0x10] sm:$0xf]
        %v365 = vld [vmem:[%s359 + $0x14] sm:$0xf]
        %v366 = vld [vmem:[%s359 + $0x18] sm:$0xf]
        %v367 = vld [vmem:[%s359 + $0x1c] sm:$0xf]
        %v368 = vld [vmem:[%s359 + $0x20] sm:$0xf]
        %v369 = vld [vmem:[%s359 + $0x24] sm:$0xf]
        %v370 = vld [vmem:[%s359 + $0x28] sm:$0xf]
        %v371 = vld [vmem:[%s359 + $0x2c] sm:$0xf]
        %v372 = vld [vmem:[%s359 + $0x30] sm:$0xf]
        %v373 = vld [vmem:[%s359 + $0x34] sm:$0xf]
        %v374 = vld [vmem:[%s359 + $0x38] sm:$0xf]
        %v375 = vld [vmem:[%s359 + $0x3c] sm:$0xf]
        %v378 = vunpack.c.l.b16 %v341
        %v379 = vunpack.c.l.b16 %v358
        %v380 = vpack.c.b16 %v379, %v378
        %v382 = vshrl.u32 %v380, 16
        %v384 = vshll.u32 %v380, 16
        %v386 = vrot.slane %v384, 1
        %v387 = vor.u32 %v382, %v386
        %v405 = vunpack.c.l.b16 %v360
        %v406 = vunpack.c.l.b16 %v361
        %v407 = vunpack.c.l.b16 %v362
        %v408 = vunpack.c.l.b16 %v363
        %v409 = vunpack.c.l.b16 %v364
        %v410 = vunpack.c.l.b16 %v365
        %v411 = vunpack.c.l.b16 %v366
        %v412 = vunpack.c.l.b16 %v367
        %v413 = vunpack.c.l.b16 %v368
        %v414 = vunpack.c.l.b16 %v369
        %v415 = vunpack.c.l.b16 %v370
        %v416 = vunpack.c.l.b16 %v371
        %v417 = vunpack.c.l.b16 %v372
        %v418 = vunpack.c.l.b16 %v373
        %v419 = vunpack.c.l.b16 %v374
        %v420 = vunpack.c.l.b16 %v375
        %v421 = vpack.c.b16 %v406, %v405
        %v422 = vpack.c.b16 %v408, %v407
        %v423 = vpack.c.b16 %v410, %v409
        %v424 = vpack.c.b16 %v412, %v411
        %v425 = vpack.c.b16 %v414, %v413
        %v426 = vpack.c.b16 %v416, %v415
        %v427 = vpack.c.b16 %v418, %v417
        %v428 = vpack.c.b16 %v420, %v419
        %437 = vmatprep.subr.bf16.mxu0 0
        %438 = vmatpush1.bf16.msra.mxu0 %v428
        %439 = vmatprep.subr.bf16.mxu0 0
        %440 = vmatpush1.bf16.msra.mxu0 %v427
        %441 = vmatprep.subr.bf16.mxu0 0
        %442 = vmatpush1.bf16.msra.mxu0 %v426
        %443 = vmatprep.subr.bf16.mxu0 0
        %444 = vmatpush1.bf16.msra.mxu0 %v425
        %445 = vmatprep.subr.bf16.mxu0 0
        %446 = vmatpush1.bf16.msra.mxu0 %v424
        %447 = vmatprep.subr.bf16.mxu0 0
        %448 = vmatpush1.bf16.msra.mxu0 %v423
        %449 = vmatprep.subr.bf16.mxu0 0
        %450 = vmatpush1.bf16.msra.mxu0 %v422
        %451 = vmatprep.subr.bf16.mxu0 0
        %452 = vmatpush1.bf16.msra.mxu0 %v421
        %453 = vmatprep.subr.bf16.mxu0 0
        %454 = vmatpush2.bf16.msra.mxu0 0
        %455 = vmatprep.subr.bf16.mxu0 0
        %456 = vmatpush2.bf16.msra.mxu0 0
        %457 = vmatprep.subr.bf16.mxu0 0
        %458 = vmatpush2.bf16.msra.mxu0 0
        %459 = vmatprep.subr.bf16.mxu0 0
        %460 = vmatpush2.bf16.msra.mxu0 0
        %461 = vmatprep.subr.bf16.mxu0 0
        %462 = vmatpush2.bf16.msra.mxu0 0
        %463 = vmatprep.subr.bf16.mxu0 0
        %464 = vmatpush2.bf16.msra.mxu0 0
        %465 = vmatprep.subr.bf16.mxu0 0
        %466 = vmatpush2.bf16.msra.mxu0 0
        %467 = vmatprep.subr.bf16.mxu0 0
        %468 = vmatpush2.bf16.msra.mxu0 0
        %469 = vmatprep.mubr.bf16.mxu0 0
        %470 = vmatmul.mubr.bf16.gmra.mxu0 %v387
        %v471 = vpop.f32.mrf.mxu0
        %v472 = vadd.f32 0.0, %v471
        %v473 = vpop.f32.mrf.mxu0
        %v474 = vpop.f32.mrf.mxu0
        %v475 = vpop.f32.mrf.mxu0
        %476 = vdwg.mxu0
        %v493 = vunpack.c.l.b16 %v342
        %v494 = vunpack.c.l.b16 %v343
        %v495 = vunpack.c.l.b16 %v344
        %v496 = vunpack.c.l.b16 %v345
        %v497 = vunpack.c.l.b16 %v346
        %v498 = vunpack.c.l.b16 %v347
        %v499 = vunpack.c.l.b16 %v348
        %v500 = vunpack.c.l.b16 %v349
        %v501 = vunpack.c.l.b16 %v350
        %v502 = vunpack.c.l.b16 %v351
        %v503 = vunpack.c.l.b16 %v352
        %v504 = vunpack.c.l.b16 %v353
        %v505 = vunpack.c.l.b16 %v354
        %v506 = vunpack.c.l.b16 %v355
        %v507 = vunpack.c.l.b16 %v356
        %v508 = vunpack.c.l.b16 %v357
        %v509 = vpack.c.b16 %v494, %v493
        %v510 = vpack.c.b16 %v496, %v495
        %v511 = vpack.c.b16 %v498, %v497
        %v512 = vpack.c.b16 %v500, %v499
        %v513 = vpack.c.b16 %v502, %v501
        %v514 = vpack.c.b16 %v504, %v503
        %v515 = vpack.c.b16 %v506, %v505
        %v516 = vpack.c.b16 %v508, %v507
        %525 = vmatprep.subr.bf16.mxu0 0
        %526 = vmatpush1.bf16.msra.mxu0 %v516
        %527 = vmatprep.subr.bf16.mxu0 0
        %528 = vmatpush1.bf16.msra.mxu0 %v515
        %529 = vmatprep.subr.bf16.mxu0 0
        %530 = vmatpush1.bf16.msra.mxu0 %v514
        %531 = vmatprep.subr.bf16.mxu0 0
        %532 = vmatpush1.bf16.msra.mxu0 %v513
        %533 = vmatprep.subr.bf16.mxu0 0
        %534 = vmatpush1.bf16.msra.mxu0 %v512
        %535 = vmatprep.subr.bf16.mxu0 0
        %536 = vmatpush1.bf16.msra.mxu0 %v511
        %537 = vmatprep.subr.bf16.mxu0 0
        %538 = vmatpush1.bf16.msra.mxu0 %v510
        %539 = vmatprep.subr.bf16.mxu0 0
        %540 = vmatpush1.bf16.msra.mxu0 %v509
        %541 = vmatprep.subr.bf16.mxu0 0
        %542 = vmatpush2.bf16.msra.mxu0 0
        %543 = vmatprep.subr.bf16.mxu0 0
        %544 = vmatpush2.bf16.msra.mxu0 0
        %545 = vmatprep.subr.bf16.mxu0 0
        %546 = vmatpush2.bf16.msra.mxu0 0
        %547 = vmatprep.subr.bf16.mxu0 0
        %548 = vmatpush2.bf16.msra.mxu0 0
        %549 = vmatprep.subr.bf16.mxu0 0
        %550 = vmatpush2.bf16.msra.mxu0 0
        %551 = vmatprep.subr.bf16.mxu0 0
        %552 = vmatpush2.bf16.msra.mxu0 0
        %553 = vmatprep.subr.bf16.mxu0 0
        %554 = vmatpush2.bf16.msra.mxu0 0
        %555 = vmatprep.subr.bf16.mxu0 0
        %556 = vmatpush2.bf16.msra.mxu0 0
        %557 = vmatprep.mubr.bf16.mxu0 0
        %558 = vmatmul.mubr.bf16.gmra.mxu0 %v341
        %v559 = vpop.f32.mrf.mxu0
        %v560 = vadd.f32 %v472, %v559
        %v561 = vpop.f32.mrf.mxu0
        %v562 = vpop.f32.mrf.mxu0
        %v563 = vpop.f32.mrf.mxu0
        %564 = vdwg.mxu0
        %v565 = vld [vmem:[#allocation2] sm:$0xe]
        %s566 = scalar_lea.vmem [#allocation8], 128
        %v567 = vld [vmem:[%s566] sm:$0xf]
        %v568 = vld [vmem:[%s566 + $0x4] sm:$0xf]
        %v569 = vld [vmem:[%s566 + $0x8] sm:$0xf]
        %v570 = vld [vmem:[%s566 + $0xc] sm:$0xf]
        %v571 = vld [vmem:[%s566 + $0x10] sm:$0xf]
        %v572 = vld [vmem:[%s566 + $0x14] sm:$0xf]
        %v573 = vld [vmem:[%s566 + $0x18] sm:$0xf]
        %v574 = vld [vmem:[%s566 + $0x1c] sm:$0xf]
        %v575 = vld [vmem:[%s566 + $0x20] sm:$0xf]
        %v576 = vld [vmem:[%s566 + $0x24] sm:$0xf]
        %v577 = vld [vmem:[%s566 + $0x28] sm:$0xf]
        %v578 = vld [vmem:[%s566 + $0x2c] sm:$0xf]
        %v579 = vld [vmem:[%s566 + $0x30] sm:$0xf]
        %v580 = vld [vmem:[%s566 + $0x34] sm:$0xf]
        %v581 = vld [vmem:[%s566 + $0x38] sm:$0xf]
        %v582 = vld [vmem:[%s566 + $0x3c] sm:$0xf]
        %v584 = vunpack.c.l.b16 %v565
        %v585 = vpack.c.b16 %v379, %v584
        %v586 = vrot.slane %v585, 1
        %v604 = vunpack.c.l.b16 %v567
        %v605 = vunpack.c.l.b16 %v568
        %v606 = vunpack.c.l.b16 %v569
        %v607 = vunpack.c.l.b16 %v570
        %v608 = vunpack.c.l.b16 %v571
        %v609 = vunpack.c.l.b16 %v572
        %v610 = vunpack.c.l.b16 %v573
        %v611 = vunpack.c.l.b16 %v574
        %v612 = vunpack.c.l.b16 %v575
        %v613 = vunpack.c.l.b16 %v576
        %v614 = vunpack.c.l.b16 %v577
        %v615 = vunpack.c.l.b16 %v578
        %v616 = vunpack.c.l.b16 %v579
        %v617 = vunpack.c.l.b16 %v580
        %v618 = vunpack.c.l.b16 %v581
        %v619 = vunpack.c.l.b16 %v582
        %v620 = vpack.c.b16 %v605, %v604
        %v621 = vpack.c.b16 %v607, %v606
        %v622 = vpack.c.b16 %v609, %v608
        %v623 = vpack.c.b16 %v611, %v610
        %v624 = vpack.c.b16 %v613, %v612
        %v625 = vpack.c.b16 %v615, %v614
        %v626 = vpack.c.b16 %v617, %v616
        %v627 = vpack.c.b16 %v619, %v618
        %636 = vmatprep.subr.bf16.mxu0 0
        %637 = vmatpush1.bf16.msra.mxu0 %v627
        %638 = vmatprep.subr.bf16.mxu0 0
        %639 = vmatpush1.bf16.msra.mxu0 %v626
        %640 = vmatprep.subr.bf16.mxu0 0
        %641 = vmatpush1.bf16.msra.mxu0 %v625
        %642 = vmatprep.subr.bf16.mxu0 0
        %643 = vmatpush1.bf16.msra.mxu0 %v624
        %644 = vmatprep.subr.bf16.mxu0 0
        %645 = vmatpush1.bf16.msra.mxu0 %v623
        %646 = vmatprep.subr.bf16.mxu0 0
        %647 = vmatpush1.bf16.msra.mxu0 %v622
        %648 = vmatprep.subr.bf16.mxu0 0
        %649 = vmatpush1.bf16.msra.mxu0 %v621
        %650 = vmatprep.subr.bf16.mxu0 0
        %651 = vmatpush1.bf16.msra.mxu0 %v620
        %652 = vmatprep.subr.bf16.mxu0 0
        %653 = vmatpush2.bf16.msra.mxu0 0
        %654 = vmatprep.subr.bf16.mxu0 0
        %655 = vmatpush2.bf16.msra.mxu0 0
        %656 = vmatprep.subr.bf16.mxu0 0
        %657 = vmatpush2.bf16.msra.mxu0 0
        %658 = vmatprep.subr.bf16.mxu0 0
        %659 = vmatpush2.bf16.msra.mxu0 0
        %660 = vmatprep.subr.bf16.mxu0 0
        %661 = vmatpush2.bf16.msra.mxu0 0
        %662 = vmatprep.subr.bf16.mxu0 0
        %663 = vmatpush2.bf16.msra.mxu0 0
        %664 = vmatprep.subr.bf16.mxu0 0
        %665 = vmatpush2.bf16.msra.mxu0 0
        %666 = vmatprep.subr.bf16.mxu0 0
        %667 = vmatpush2.bf16.msra.mxu0 0
        %668 = vmatprep.mubr.bf16.mxu0 0
        %669 = vmatmul.mubr.bf16.gmra.mxu0 %v586
        %v670 = vpop.f32.mrf.mxu0
        %v671 = vadd.f32 0.0, %v670
        %v672 = vpop.f32.mrf.mxu0
        %v673 = vpop.f32.mrf.mxu0
        %v674 = vpop.f32.mrf.mxu0
        %675 = vdwg.mxu0
        %v676 = vadd.f32 %v560, %v671
        %v677 = vld [vmem:[#allocation2 + $0x4] sm:$0x3]
        %s678 = scalar_lea.vmem [#allocation8], 192
        %v679 = vld [vmem:[%s678] sm:$0xf]
        %v680 = vld [vmem:[%s678 + $0x4] sm:$0xf]
        %v681 = vld [vmem:[%s678 + $0x8] sm:$0xf]
        %v682 = vld [vmem:[%s678 + $0xc] sm:$0xf]
        %v683 = vld [vmem:[%s678 + $0x10] sm:$0xf]
        %v684 = vld [vmem:[%s678 + $0x14] sm:$0xf]
        %v685 = vld [vmem:[%s678 + $0x18] sm:$0xf]
        %v686 = vld [vmem:[%s678 + $0x1c] sm:$0xf]
        %v687 = vld [vmem:[%s678 + $0x20] sm:$0xf]
        %v688 = vld [vmem:[%s678 + $0x24] sm:$0xf]
        %v689 = vld [vmem:[%s678 + $0x28] sm:$0xf]
        %v690 = vld [vmem:[%s678 + $0x2c] sm:$0xf]
        %v691 = vld [vmem:[%s678 + $0x30] sm:$0xf]
        %v692 = vld [vmem:[%s678 + $0x34] sm:$0xf]
        %v693 = vld [vmem:[%s678 + $0x38] sm:$0xf]
        %v694 = vld [vmem:[%s678 + $0x3c] sm:$0xf]
        %v696 = vunpack.c.l.b16 %v677
        %v697 = vpack.c.b16 %v696, %v584
        %v699 = vshrl.u32 %v697, 16
        %v701 = vrot.slane %v699, 1
        %v702 = vshll.u32 %v697, 16
        %v704 = vrot.slane %v702, 2
        %v705 = vor.u32 %v701, %v704
        %v723 = vunpack.c.l.b16 %v679
        %v724 = vunpack.c.l.b16 %v680
        %v725 = vunpack.c.l.b16 %v681
        %v726 = vunpack.c.l.b16 %v682
        %v727 = vunpack.c.l.b16 %v683
        %v728 = vunpack.c.l.b16 %v684
        %v729 = vunpack.c.l.b16 %v685
        %v730 = vunpack.c.l.b16 %v686
        %v731 = vunpack.c.l.b16 %v687
        %v732 = vunpack.c.l.b16 %v688
        %v733 = vunpack.c.l.b16 %v689
        %v734 = vunpack.c.l.b16 %v690
        %v735 = vunpack.c.l.b16 %v691
        %v736 = vunpack.c.l.b16 %v692
        %v737 = vunpack.c.l.b16 %v693
        %v738 = vunpack.c.l.b16 %v694
        %v739 = vpack.c.b16 %v724, %v723
        %v740 = vpack.c.b16 %v726, %v725
        %v741 = vpack.c.b16 %v728, %v727
        %v742 = vpack.c.b16 %v730, %v729
        %v743 = vpack.c.b16 %v732, %v731
        %v744 = vpack.c.b16 %v734, %v733
        %v745 = vpack.c.b16 %v736, %v735
        %v746 = vpack.c.b16 %v738, %v737
        %755 = vmatprep.subr.bf16.mxu0 0
        %756 = vmatpush1.bf16.msra.mxu0 %v746
        %757 = vmatprep.subr.bf16.mxu0 0
        %758 = vmatpush1.bf16.msra.mxu0 %v745
        %759 = vmatprep.subr.bf16.mxu0 0
        %760 = vmatpush1.bf16.msra.mxu0 %v744
        %761 = vmatprep.subr.bf16.mxu0 0
        %762 = vmatpush1.bf16.msra.mxu0 %v743
        %763 = vmatprep.subr.bf16.mxu0 0
        %764 = vmatpush1.bf16.msra.mxu0 %v742
        %765 = vmatprep.subr.bf16.mxu0 0
        %766 = vmatpush1.bf16.msra.mxu0 %v741
        %767 = vmatprep.subr.bf16.mxu0 0
        %768 = vmatpush1.bf16.msra.mxu0 %v740
        %769 = vmatprep.subr.bf16.mxu0 0
        %770 = vmatpush1.bf16.msra.mxu0 %v739
        %771 = vmatprep.subr.bf16.mxu0 0
        %772 = vmatpush2.bf16.msra.mxu0 0
        %773 = vmatprep.subr.bf16.mxu0 0
        %774 = vmatpush2.bf16.msra.mxu0 0
        %775 = vmatprep.subr.bf16.mxu0 0
        %776 = vmatpush2.bf16.msra.mxu0 0
        %777 = vmatprep.subr.bf16.mxu0 0
        %778 = vmatpush2.bf16.msra.mxu0 0
        %779 = vmatprep.subr.bf16.mxu0 0
        %780 = vmatpush2.bf16.msra.mxu0 0
        %781 = vmatprep.subr.bf16.mxu0 0
        %782 = vmatpush2.bf16.msra.mxu0 0
        %783 = vmatprep.subr.bf16.mxu0 0
        %784 = vmatpush2.bf16.msra.mxu0 0
        %785 = vmatprep.subr.bf16.mxu0 0
        %786 = vmatpush2.bf16.msra.mxu0 0
        %787 = vmatprep.mubr.bf16.mxu0 0
        %788 = vmatmul.mubr.bf16.gmra.mxu0 %v705
        %v789 = vpop.f32.mrf.mxu0
        %v790 = vadd.f32 0.0, %v789
        %v791 = vpop.f32.mrf.mxu0
        %v792 = vpop.f32.mrf.mxu0
        %v793 = vpop.f32.mrf.mxu0
        %794 = vdwg.mxu0
        %v795 = vadd.f32 %v676, %v790
        %v796 = vld [vmem:[#allocation2] sm:$0xc]
        %s797 = scalar_lea.vmem [#allocation8], 256
        %v798 = vld [vmem:[%s797] sm:$0xf]
        %v799 = vld [vmem:[%s797 + $0x4] sm:$0xf]
        %v800 = vld [vmem:[%s797 + $0x8] sm:$0xf]
        %v801 = vld [vmem:[%s797 + $0xc] sm:$0xf]
        %v802 = vld [vmem:[%s797 + $0x10] sm:$0xf]
        %v803 = vld [vmem:[%s797 + $0x14] sm:$0xf]
        %v804 = vld [vmem:[%s797 + $0x18] sm:$0xf]
        %v805 = vld [vmem:[%s797 + $0x1c] sm:$0xf]
        %v806 = vld [vmem:[%s797 + $0x20] sm:$0xf]
        %v807 = vld [vmem:[%s797 + $0x24] sm:$0xf]
        %v808 = vld [vmem:[%s797 + $0x28] sm:$0xf]
        %v809 = vld [vmem:[%s797 + $0x2c] sm:$0xf]
        %v810 = vld [vmem:[%s797 + $0x30] sm:$0xf]
        %v811 = vld [vmem:[%s797 + $0x34] sm:$0xf]
        %v812 = vld [vmem:[%s797 + $0x38] sm:$0xf]
        %v813 = vld [vmem:[%s797 + $0x3c] sm:$0xf]
        %v815 = vunpack.c.l.b16 %v796
        %v816 = vpack.c.b16 %v696, %v815
        %v817 = vrot.slane %v816, 2
        %v835 = vunpack.c.l.b16 %v798
        %v836 = vunpack.c.l.b16 %v799
        %v837 = vunpack.c.l.b16 %v800
        %v838 = vunpack.c.l.b16 %v801
        %v839 = vunpack.c.l.b16 %v802
        %v840 = vunpack.c.l.b16 %v803
        %v841 = vunpack.c.l.b16 %v804
        %v842 = vunpack.c.l.b16 %v805
        %v843 = vunpack.c.l.b16 %v806
        %v844 = vunpack.c.l.b16 %v807
        %v845 = vunpack.c.l.b16 %v808
        %v846 = vunpack.c.l.b16 %v809
        %v847 = vunpack.c.l.b16 %v810
        %v848 = vunpack.c.l.b16 %v811
        %v849 = vunpack.c.l.b16 %v812
        %v850 = vunpack.c.l.b16 %v813
        %v851 = vpack.c.b16 %v836, %v835
        %v852 = vpack.c.b16 %v838, %v837
        %v853 = vpack.c.b16 %v840, %v839
        %v854 = vpack.c.b16 %v842, %v841
        %v855 = vpack.c.b16 %v844, %v843
        %v856 = vpack.c.b16 %v846, %v845
        %v857 = vpack.c.b16 %v848, %v847
        %v858 = vpack.c.b16 %v850, %v849
        %867 = vmatprep.subr.bf16.mxu0 0
        %868 = vmatpush1.bf16.msra.mxu0 %v858
        %869 = vmatprep.subr.bf16.mxu0 0
        %870 = vmatpush1.bf16.msra.mxu0 %v857
        %871 = vmatprep.subr.bf16.mxu0 0
        %872 = vmatpush1.bf16.msra.mxu0 %v856
        %873 = vmatprep.subr.bf16.mxu0 0
        %874 = vmatpush1.bf16.msra.mxu0 %v855
        %875 = vmatprep.subr.bf16.mxu0 0
        %876 = vmatpush1.bf16.msra.mxu0 %v854
        %877 = vmatprep.subr.bf16.mxu0 0
        %878 = vmatpush1.bf16.msra.mxu0 %v853
        %879 = vmatprep.subr.bf16.mxu0 0
        %880 = vmatpush1.bf16.msra.mxu0 %v852
        %881 = vmatprep.subr.bf16.mxu0 0
        %882 = vmatpush1.bf16.msra.mxu0 %v851
        %883 = vmatprep.subr.bf16.mxu0 0
        %884 = vmatpush2.bf16.msra.mxu0 0
        %885 = vmatprep.subr.bf16.mxu0 0
        %886 = vmatpush2.bf16.msra.mxu0 0
        %887 = vmatprep.subr.bf16.mxu0 0
        %888 = vmatpush2.bf16.msra.mxu0 0
        %889 = vmatprep.subr.bf16.mxu0 0
        %890 = vmatpush2.bf16.msra.mxu0 0
        %891 = vmatprep.subr.bf16.mxu0 0
        %892 = vmatpush2.bf16.msra.mxu0 0
        %893 = vmatprep.subr.bf16.mxu0 0
        %894 = vmatpush2.bf16.msra.mxu0 0
        %895 = vmatprep.subr.bf16.mxu0 0
        %896 = vmatpush2.bf16.msra.mxu0 0
        %897 = vmatprep.subr.bf16.mxu0 0
        %898 = vmatpush2.bf16.msra.mxu0 0
        %899 = vmatprep.mubr.bf16.mxu0 0
        %900 = vmatmul.mubr.bf16.gmra.mxu0 %v817
        %v901 = vpop.f32.mrf.mxu0
        %v902 = vadd.f32 0.0, %v901
        %v903 = vpop.f32.mrf.mxu0
        %v904 = vpop.f32.mrf.mxu0
        %v905 = vpop.f32.mrf.mxu0
        %906 = vdwg.mxu0
        %v907 = vadd.f32 %v795, %v902
        %v908 = vld [vmem:[%s4] sm:$0x1]
        %v910 = vlaneseq
        %v911 = vshrl.u32 %v910, 7
        %v912 = vsub.s32 0, %v911
        %v913 = vrot.slane %v908, %v912
        %v915 = vadd.f32 %v907, %v913
        %v916 = vmax.f32 %v915, 0.0
        %917 = vst [vmem:[%s268] sm:$0xff] %v916
        %s918 = sand.u32 %s141, 1
        %s919 = scalar_lea.sflag [#allocation5], %s918
        %s920 = sand.u32 %s141, 1
        %s921 = smul.addr %s920, 8
        %s922 = scalar_lea.vmem [#allocation9], %s921
        // Predicated region
        $region53: #{tpu_custom_call.1} parent=39 // pred_check
          %p923 = pneg %p151
        $region54: #{tpu_custom_call.1} parent=39 // pred_check_branch
          %925 = sbr.rel (%p923) target = $region56
        $region55: #{tpu_custom_call.1} parent=39 // pred_region
          %s927 = ssub.s32 128, 128
          %928 = vsyncadd %s919, %s927
          %s929 = smul.addr %s23, 128
          %s930 = scalar_lea.hbm %s5, %s929
          %s932 = sshll.u32 %s922, 4
          %s933 = int_to_ptr.vmem [resolvable:$true] %s932
          %935 = dma.vmem_to_hbm [thread:$0]  %s933, 128, %s930, %s919
        $region56: #{tpu_custom_call.1} parent=39 // pred_fallthru
          _
      $region40: #{tpu_custom_call.1} parent=5 // pred_fallthru
        _
      %p936 = scmp.le.s32.totalorder 2, %s18
      // Predicated region
      $region57: #{tpu_custom_call.1} parent=5 // pred_check
        %p937 = pneg %p936
      $region58: #{tpu_custom_call.1} parent=5 // pred_check_branch
        %939 = sbr.rel (%p937) target = $region60
      $region59: #{tpu_custom_call.1} parent=5 // pred_region
        %s940 = ssub.s32 %s18, 2
        // Predicated region
        $region61: #{tpu_custom_call.1} parent=59 // pred_check
          %p941 = pneg %p157
        $region62: #{tpu_custom_call.1} parent=59 // pred_check_branch
          %943 = sbr.rel (%p941) target = $region64
        $region63: #{tpu_custom_call.1} parent=59 // pred_region
          %s944 = sand.u32 %s142, 1
          %s945 = scalar_lea.sflag [#allocation5], %s944
          %s946 = sand.u32 %s142, 1
          %s947 = smul.addr %s946, 8
          %s948 = scalar_lea.vmem [#allocation9], %s947
          %949 = dma.done %s945, 128
        $region64: #{tpu_custom_call.1} parent=59 // pred_fallthru
          _
      $region60: #{tpu_custom_call.1} parent=5 // pred_fallthru
        _
    $region6: #{tpu_custom_call.1} parent=1 // loop_footer
      %s22 = sadd.s32 1, %s18
    $region7: #{tpu_custom_call.1} parent=1 // loop_footer_branch
      %17 = sbr.rel target = $region3
    $region8: #{tpu_custom_call.1} parent=1 // loop_exit
      _
    %950 = vsyncpa [#allocation4], 1
    %s951 = scalar_lea.sflag [#allocation4], 1
    %952 = vsyncpa %s951, 1
    %953 = vsyncpa [#allocation7], 1
    %954 = vsyncpa [#allocation5], 1
    %s955 = scalar_lea.sflag [#allocation5], 1
    %956 = vsyncpa %s955, 1

// kernel: tpu_custom_call.1
$region0: #{tpu_custom_call.1}
  #allocation0 [shape = 'u32[]', space=smem, size = 0x4, offset = 0x4, fixed_abs, tag = 'smem constant byte address 0x4 - core index']
  #allocation1 [shape = 'u32[144,128]{1,0:T(1,128)}', space=vmem, size = 0x12000, scoped, tag = 'internal scratch']
  #allocation2 [shape = 'bf16[1,12,128]{2,1,0:T(8,128)(2,1)}', space=vmem, size = 0x1000, scoped, tag = 'scratch operand']
  %s0 = inlined_call_operand.hbm [shape: bf16[2,8,16], index: 0, kind: input, shape index: {}]
  %s1 = inlined_call_operand.hbm [shape: bf16[16,128], index: 1, kind: input, shape index: {}]
  %s2 = inlined_call_operand.vmem [shape: f32[1,128], index: 2, kind: input, shape index: {}]
  %s3 = inlined_call_operand.hbm [shape: bf16[5,128,128], index: 3, kind: input, shape index: {}]
  %s4 = inlined_call_operand.vmem [shape: f32[1,128], index: 4, kind: input, shape index: {}]
  %s5 = inlined_call_operand.hbm [shape: f32[2,8,128], index: 5, kind: output, shape index: {}]
  %s6 = sld [smem:[#allocation0]]
  $region65: #{tpu_custom_call.1} parent=0
    _
  %s8 = ssub.s32 1, %s6
  %s9 = scalar_select 0, %s8, %s6
  $region1: #{tpu_custom_call.1} parent=0
    #allocation3 [shape = 'u8[4096]{0}', space=vmem, size = 0x1000, scoped, tag = 'input window, operand 0']
    #allocation4 [shape = 's32[2]{0}', space=sflag, size = 0x8, scoped, tag = 'scoped memory for tpu_custom_call.1']
    #allocation5 [shape = 's32[2]{0}', space=sflag, size = 0x8, scoped, tag = 'scoped memory for tpu_custom_call.1']
    #allocation6 [shape = 'u8[4096]{0}', space=vmem, size = 0x1000, scoped, tag = 'input window, operand 1, single buffered']
    #allocation7 [shape = 's32[1]{0}', space=sflag, size = 0x4, scoped, tag = 'scoped memory for tpu_custom_call.1']
    #allocation8 [shape = 'u8[163840]{0}', space=vmem, size = 0x28000, scoped, tag = 'input window, operand 3, single buffered']
    #allocation9 [shape = 'u8[8192]{0}', space=vmem, size = 0x2000, scoped, tag = 'output window, operand 0']
    %10 = vsyncpa [#allocation4], 0
    %s11 = scalar_lea.sflag [#allocation4], 1
    %12 = vsyncpa %s11, 0
    %13 = vsyncpa [#allocation7], 0
    %14 = vsyncpa [#allocation5], 0
    %s15 = scalar_lea.sflag [#allocation5], 1
    %16 = vsyncpa %s15, 0
    loop: start=0, step=1, limit=4
    $region2: #{tpu_custom_call.1} parent=1 // loop_pre_header
      _
    $region3: #{tpu_custom_call.1} parent=1 // loop_header
      %s18 = sphi 0, %s22
      %p19 = scmp.ge.s32.totalorder %s18, 4
      %s28 = sphi 0, %s30
      %s31 = sphi 0, %s28
      %s32 = sphi 0, %s31
      %s48 = sphi 0, %s32
      %s52 = sphi 0, %s52
      %s54 = sphi 0, %s52
      %s55 = sphi 0, %s54
      %s69 = sphi 0, %s55
      %s73 = sphi 0, %s73
      %s75 = sphi 0, %s73
      %s76 = sphi 0, %s75
      %s90 = sphi 0, %s76
      %s94 = sphi 0, %s94
      %s96 = sphi 0, %s94
      %s97 = sphi 0, %s96
      %s111 = sphi 0, %s97
      %s115 = sphi 0, %s115
      %s117 = sphi 0, %s115
      %s118 = sphi 0, %s117
      %s132 = sphi 0, %s118
      %s138 = sphi 0, %s140
      %s141 = sphi 0, %s138
      %s142 = sphi 0, %s141
      %s158 = sphi 0, %s142
    $region4: #{tpu_custom_call.1} parent=1 // loop_header_branch
      %21 = sbr.rel (%p19) target = $region8
    $region5: #{tpu_custom_call.1} parent=1 // loop_body
      %s23 = ssub.s32 %s18, 1
      %s24 = ssub.s32 %s18, 2
      %s25 = sadd.s32 %s18, 1
      %s26 = ssub.s32 %s18, %s25
      %p27 = scmp.eq.s32.totalorder %s26, 0
      %s29 = sadd.s32 %s28, 1
      %s30 = scalar_select %p27, %s28, %s29
      %p33 = pneg %p27
      %p34 = scmp.eq.s32.totalorder %s18, 1
      %p35 = por %p33, %p34
      %p36 = scmp.ne.s32.totalorder %s28, %s31
      %p37 = scmp.eq.s32.totalorder %s18, 0
      %p38 = por %p36, %p37
      %p39 = scmp.ne.s32.totalorder %s28, %s31
      %p40 = scmp.eq.s32.totalorder %s23, 1
      %p41 = por %p39, %p40
      %p42 = scmp.ne.s32.totalorder %s31, %s32
      %p43 = scmp.eq.s32.totalorder %s23, 0
      %p44 = por %p42, %p43
      %p45 = scmp.ne.s32.totalorder %s31, %s32
      %p46 = scmp.eq.s32.totalorder %s24, 1
      %p47 = por %p45, %p46
      %p49 = scmp.ne.s32.totalorder %s32, %s48
      %p50 = scmp.eq.s32.totalorder %s24, 0
      %p51 = por %p49, %p50
      %s53 = sadd.s32 %s52, 1
      %p56 = scmp.eq.s32.totalorder %s18, 1
      %p57 = scmp.ne.s32.totalorder %s52, %s54
      %p58 = scmp.eq.s32.totalorder %s18, 0
      %p59 = por %p57, %p58
      %p60 = scmp.ne.s32.totalorder %s52, %s54
      %p61 = scmp.eq.s32.totalorder %s23, 1
      %p62 = por %p60, %p61
      %p63 = scmp.ne.s32.totalorder %s54, %s55
      %p64 = scmp.eq.s32.totalorder %s23, 0
      %p65 = por %p63, %p64
      %p66 = scmp.ne.s32.totalorder %s54, %s55
      %p67 = scmp.eq.s32.totalorder %s24, 1
      %p68 = por %p66, %p67
      %p70 = scmp.ne.s32.totalorder %s55, %s69
      %p71 = scmp.eq.s32.totalorder %s24, 0
      %p72 = por %p70, %p71
      %s74 = sadd.s32 %s73, 1
      %p77 = scmp.eq.s32.totalorder %s18, 1
      %p78 = scmp.ne.s32.totalorder %s73, %s75
      %p79 = scmp.eq.s32.totalorder %s18, 0
      %p80 = por %p78, %p79
      %p81 = scmp.ne.s32.totalorder %s73, %s75
      %p82 = scmp.eq.s32.totalorder %s23, 1
      %p83 = por %p81, %p82
      %p84 = scmp.ne.s32.totalorder %s75, %s76
      %p85 = scmp.eq.s32.totalorder %s23, 0
      %p86 = por %p84, %p85
      %p87 = scmp.ne.s32.totalorder %s75, %s76
      %p88 = scmp.eq.s32.totalorder %s24, 1
      %p89 = por %p87, %p88
      %p91 = scmp.ne.s32.totalorder %s76, %s90
      %p92 = scmp.eq.s32.totalorder %s24, 0
      %p93 = por %p91, %p92
      %s95 = sadd.s32 %s94, 1
      %p98 = scmp.eq.s32.totalorder %s18, 1
      %p99 = scmp.ne.s32.totalorder %s94, %s96
      %p100 = scmp.eq.s32.totalorder %s18, 0
      %p101 = por %p99, %p100
      %p102 = scmp.ne.s32.totalorder %s94, %s96
      %p103 = scmp.eq.s32.totalorder %s23, 1
      %p104 = por %p102, %p103
      %p105 = scmp.ne.s32.totalorder %s96, %s97
      %p106 = scmp.eq.s32.totalorder %s23, 0
      %p107 = por %p105, %p106
      %p108 = scmp.ne.s32.totalorder %s96, %s97
      %p109 = scmp.eq.s32.totalorder %s24, 1
      %p110 = por %p108, %p109
      %p112 = scmp.ne.s32.totalorder %s97, %s111
      %p113 = scmp.eq.s32.totalorder %s24, 0
      %p114 = por %p112, %p113
      %s116 = sadd.s32 %s115, 1
      %p119 = scmp.eq.s32.totalorder %s18, 1
      %p120 = scmp.ne.s32.totalorder %s115, %s117
      %p121 = scmp.eq.s32.totalorder %s18, 0
      %p122 = por %p120, %p121
      %p123 = scmp.ne.s32.totalorder %s115, %s117
      %p124 = scmp.eq.s32.totalorder %s23, 1
      %p125 = por %p123, %p124
      %p126 = scmp.ne.s32.totalorder %s117, %s118
      %p127 = scmp.eq.s32.totalorder %s23, 0
      %p128 = por %p126, %p127
      %p129 = scmp.ne.s32.totalorder %s117, %s118
      %p130 = scmp.eq.s32.totalorder %s24, 1
      %p131 = por %p129, %p130
      %p133 = scmp.ne.s32.totalorder %s118, %s132
      %p134 = scmp.eq.s32.totalorder %s24, 0
      %p135 = por %p133, %p134
      %s136 = ssub.s32 %s18, %s25
      %p137 = scmp.eq.s32.totalorder %s136, 0
      %s139 = sadd.s32 %s138, 1
      %s140 = scalar_select %p137, %s138, %s139
      %p143 = pneg %p137
      %p144 = scmp.eq.s32.totalorder %s18, 1
      %p145 = por %p143, %p144
      %p146 = scmp.ne.s32.totalorder %s138, %s141
      %p147 = scmp.eq.s32.totalorder %s18, 0
      %p148 = por %p146, %p147
      %p149 = scmp.ne.s32.totalorder %s138, %s141
      %p150 = scmp.eq.s32.totalorder %s23, 1
      %p151 = por %p149, %p150
      %p152 = scmp.ne.s32.totalorder %s141, %s142
      %p153 = scmp.eq.s32.totalorder %s23, 0
      %p154 = por %p152, %p153
      %p155 = scmp.ne.s32.totalorder %s141, %s142
      %p156 = scmp.eq.s32.totalorder %s24, 1
      %p157 = por %p155, %p156
      %p159 = scmp.ne.s32.totalorder %s142, %s158
      %p160 = scmp.eq.s32.totalorder %s24, 0
      %p161 = por %p159, %p160
      %p162 = scmp.le.s32.totalorder 1, %s18
      %p163 = scmp.lt.s32.totalorder %s18, 3
      %p164 = pnand %p162, %p163
      %p165 = pneg %p164
      // Predicated region
      $region9: #{tpu_custom_call.1} parent=5 // pred_check
        _
      $region10: #{tpu_custom_call.1} parent=5 // pred_check_branch
        %167 = sbr.rel (%p164) target = $region12
      $region11: #{tpu_custom_call.1} parent=5 // pred_region
        %s168 = ssub.s32 %s18, 1
        // Predicated region
        $region13: #{tpu_custom_call.1} parent=11 // pred_check
          %p169 = pneg %p65
        $region14: #{tpu_custom_call.1} parent=11 // pred_check_branch
          %171 = sbr.rel (%p169) target = $region16
        $region15: #{tpu_custom_call.1} parent=11 // pred_region
          %s173 = ssub.s32 128, 128
          %174 = vsyncadd [#allocation7], %s173
          %s175 = sshll.u32 [#allocation6], 4
          %s176 = int_to_ptr.vmem [resolvable:$true] %s175
          %181 = dma.hbm_to_vmem [thread:$0]  %s1, 128, %s176, [#allocation7], 64, 64, 4
        $region16: #{tpu_custom_call.1} parent=11 // pred_fallthru
          _
        // Predicated region
        $region17: #{tpu_custom_call.1} parent=11 // pred_check
          %p182 = pneg %p86
        $region18: #{tpu_custom_call.1} parent=11 // pred_check_branch
          %184 = sbr.rel (%p182) target = $region20
        $region19: #{tpu_custom_call.1} parent=11 // pred_region
          _
        $region20: #{tpu_custom_call.1} parent=11 // pred_fallthru
          _
        // Predicated region
        $region21: #{tpu_custom_call.1} parent=11 // pred_check
          %p185 = pneg %p107
        $region22: #{tpu_custom_call.1} parent=11 // pred_check_branch
          %187 = sbr.rel (%p185) target = $region24
        $region23: #{tpu_custom_call.1} parent=11 // pred_region
          %s189 = ssub.s32 5120, 5120
          %190 = vsyncadd [#allocation7], %s189
          %s191 = sshll.u32 [#allocation8], 4
          %s192 = int_to_ptr.vmem [resolvable:$true] %s191
          %197 = dma.hbm_to_vmem [thread:$0]  %s3, 5120, %s192, [#allocation7], 64, 64, 4
        $region24: #{tpu_custom_call.1} parent=11 // pred_fallthru
          _
        // Predicated region
        $region25: #{tpu_custom_call.1} parent=11 // pred_check
          %p198 = pneg %p128
        $region26: #{tpu_custom_call.1} parent=11 // pred_check_branch
          %200 = sbr.rel (%p198) target = $region28
        $region27: #{tpu_custom_call.1} parent=11 // pred_region
          _
        $region28: #{tpu_custom_call.1} parent=11 // pred_fallthru
          _
      $region12: #{tpu_custom_call.1} parent=5 // pred_fallthru
        _
      %p201 = scmp.lt.s32.totalorder %s18, 2
      // Predicated region
      $region29: #{tpu_custom_call.1} parent=5 // pred_check
        %p202 = pneg %p201
      $region30: #{tpu_custom_call.1} parent=5 // pred_check_branch
        %204 = sbr.rel (%p202) target = $region32
      $region31: #{tpu_custom_call.1} parent=5 // pred_region
        // Predicated region
        $region33: #{tpu_custom_call.1} parent=31 // pred_check
          %p205 = pneg %p38
        $region34: #{tpu_custom_call.1} parent=31 // pred_check_branch
          %207 = sbr.rel (%p205) target = $region36
        $region35: #{tpu_custom_call.1} parent=31 // pred_region
          %s208 = sand.u32 %s28, 1
          %s209 = scalar_lea.sflag [#allocation4], %s208
          %s210 = sand.u32 %s28, 1
          %s211 = smul.addr %s210, 4
          %s212 = scalar_lea.vmem [#allocation3], %s211
          %s214 = ssub.s32 64, 64
          %215 = vsyncadd %s209, %s214
          %s216 = smul.addr %s18, 64
          %s217 = scalar_lea.hbm %s0, %s216
          %s219 = sshll.u32 %s212, 4
          %s220 = int_to_ptr.vmem [resolvable:$true] %s219
          %222 = dma.hbm_to_vmem [thread:$0]  %s217, 64, %s220, %s209
        $region36: #{tpu_custom_call.1} parent=31 // pred_fallthru
          _
      $region32: #{tpu_custom_call.1} parent=5 // pred_fallthru
        _
      %p223 = scmp.le.s32.totalorder 1, %s18
      %p224 = scmp.lt.s32.totalorder %s18, 3
      %p225 = pnand %p223, %p224
      %p226 = pneg %p225
      // Predicated region
      $region37: #{tpu_custom_call.1} parent=5 // pred_check
        _
      $region38: #{tpu_custom_call.1} parent=5 // pred_check_branch
        %228 = sbr.rel (%p225) target = $region40
      $region39: #{tpu_custom_call.1} parent=5 // pred_region
        %s229 = ssub.s32 %s18, 1
        %s230 = sand.u32 %s31, 1
        %s231 = scalar_lea.sflag [#allocation4], %s230
        %s232 = sand.u32 %s31, 1
        %s233 = smul.addr %s232, 4
        %s234 = scalar_lea.vmem [#allocation3], %s233
        // Predicated region
        $region41: #{tpu_custom_call.1} parent=39 // pred_check
          %p235 = pneg %p44
        $region42: #{tpu_custom_call.1} parent=39 // pred_check_branch
          %237 = sbr.rel (%p235) target = $region44
        $region43: #{tpu_custom_call.1} parent=39 // pred_region
          %238 = dma.done %s231, 64
        $region44: #{tpu_custom_call.1} parent=39 // pred_fallthru
          _
        // Predicated region
        $region45: #{tpu_custom_call.1} parent=39 // pred_check
          %p239 = pneg %p65
        $region46: #{tpu_custom_call.1} parent=39 // pred_check_branch
          %241 = sbr.rel (%p239) target = $region48
        $region47: #{tpu_custom_call.1} parent=39 // pred_region
          %242 = dma.done [#allocation7], 128
        $region48: #{tpu_custom_call.1} parent=39 // pred_fallthru
          _
        // Predicated region
        $region49: #{tpu_custom_call.1} parent=39 // pred_check
          %p243 = pneg %p107
        $region50: #{tpu_custom_call.1} parent=39 // pred_check_branch
          %245 = sbr.rel (%p243) target = $region52
        $region51: #{tpu_custom_call.1} parent=39 // pred_region
          %246 = dma.done [#allocation7], 5120
        $region52: #{tpu_custom_call.1} parent=39 // pred_fallthru
          _
        %s247 = sand.u32 %s31, 1
        %s248 = scalar_lea.sflag [#allocation4], %s247
        %s249 = sand.u32 %s31, 1
        %s250 = smul.addr %s249, 4
        %s251 = scalar_lea.vmem [#allocation3], %s250
        %p252 = pneg %p44
        %p253 = pneg %p41
        %p254 = pneg %p65
        %p255 = pneg %p62
        %p256 = pneg %p86
        %p257 = pneg %p83
        %p258 = pneg %p107
        %p259 = pneg %p104
        %p260 = pneg %p128
        %p261 = pneg %p125
        %p262 = pneg %p154
        %p263 = pneg %p151
        %s264 = sand.u32 %s141, 1
        %s265 = scalar_lea.sflag [#allocation5], %s264
        %s266 = sand.u32 %s141, 1
        %s267 = smul.addr %s266, 8
        %s268 = scalar_lea.vmem [#allocation9], %s267
        %v270 = vld [vmem:[%s234] sm:$0xf]
        %v271 = vld [vmem:[#allocation6] sm:$0xf]
        %v272 = vld [vmem:[#allocation6 + $0x4] sm:$0xf]
        %v273 = vld [vmem:[%s2] sm:$0x1]
        %v275 = vlaneseq
        %v276 = vshrl.u32 %v275, 7
        %v277 = vsub.s32 0, %v276
        %v278 = vrot.slane %v273, %v277
        %v282 = vunpack.c.l.b16 %v271
        %v283 = vunpack.c.l.b16 %v272
        %v284 = vpack.c.b16 %v283, %v282
        %vm286 = vcmask 130048
        %v288 = vsel %vm286, %v270, 0
        %290 = vmatprep.subr.bf16.mxu0 0
        %291 = vmatpush1.bf16.msra.mxu0 0
        %292 = vmatprep.subr.bf16.mxu0 0
        %293 = vmatpush1.bf16.msra.mxu0 0
        %294 = vmatprep.subr.bf16.mxu0 0
        %295 = vmatpush1.bf16.msra.mxu0 0
        %296 = vmatprep.subr.bf16.mxu0 0
        %297 = vmatpush1.bf16.msra.mxu0 0
        %298 = vmatprep.subr.bf16.mxu0 0
        %299 = vmatpush1.bf16.msra.mxu0 0
        %300 = vmatprep.subr.bf16.mxu0 0
        %301 = vmatpush1.bf16.msra.mxu0 0
        %302 = vmatprep.subr.bf16.mxu0 0
        %303 = vmatpush1.bf16.msra.mxu0 0
        %304 = vmatprep.subr.bf16.mxu0 0
        %305 = vmatpush1.bf16.msra.mxu0 %v284
        %306 = vmatprep.subr.bf16.mxu0 0
        %307 = vmatpush2.bf16.msra.mxu0 0
        %308 = vmatprep.subr.bf16.mxu0 0
        %309 = vmatpush2.bf16.msra.mxu0 0
        %310 = vmatprep.subr.bf16.mxu0 0
        %311 = vmatpush2.bf16.msra.mxu0 0
        %312 = vmatprep.subr.bf16.mxu0 0
        %313 = vmatpush2.bf16.msra.mxu0 0
        %314 = vmatprep.subr.bf16.mxu0 0
        %315 = vmatpush2.bf16.msra.mxu0 0
        %316 = vmatprep.subr.bf16.mxu0 0
        %317 = vmatpush2.bf16.msra.mxu0 0
        %318 = vmatprep.subr.bf16.mxu0 0
        %319 = vmatpush2.bf16.msra.mxu0 0
        %320 = vmatprep.subr.bf16.mxu0 0
        %321 = vmatpush2.bf16.msra.mxu0 0
        %322 = vmatprep.mubr.bf16.mxu0 0
        %323 = vmatmul.mubr.bf16.gmra.mxu0 %v288
        %v324 = vpop.f32.mrf.mxu0
        %v325 = vadd.f32 %v278, %v324
        %v326 = vpop.f32.mrf.mxu0
        %v327 = vpop.f32.mrf.mxu0
        %v328 = vpop.f32.mrf.mxu0
        %329 = vdwg.mxu0
        %330 = vst [vmem:[#allocation2] sm:$0x3] 0
        %v331 = vpack.c.bf16 %v325, %v325
        %v333 = vunpack.c.l.b16 %v331
        %v334 = vpack.c.b16 %v333, %v333
        %v335 = vrot.slane %v334, 6
        %v336 = vrot.slane %v335, 4
        %339 = vst [vmem:[#allocation2] sm:$0xc] %v335
        %340 = vst [vmem:[#allocation2 + $0x4] sm:$0x3] %v336
        %v341 = vld [vmem:[#allocation2] sm:$0xf]
        %v342 = vld [vmem:[#allocation8] sm:$0xf]
        %v343 = vld [vmem:[#allocation8 + $0x4] sm:$0xf]
        %v344 = vld [vmem:[#allocation8 + $0x8] sm:$0xf]
        %v345 = vld [vmem:[#allocation8 + $0xc] sm:$0xf]
        %v346 = vld [vmem:[#allocation8 + $0x10] sm:$0xf]
        %v347 = vld [vmem:[#allocation8 + $0x14] sm:$0xf]
        %v348 = vld [vmem:[#allocation8 + $0x18] sm:$0xf]
        %v349 = vld [vmem:[#allocation8 + $0x1c] sm:$0xf]
        %v350 = vld [vmem:[#allocation8 + $0x20] sm:$0xf]
        %v351 = vld [vmem:[#allocation8 + $0x24] sm:$0xf]
        %v352 = vld [vmem:[#allocation8 + $0x28] sm:$0xf]
        %v353 = vld [vmem:[#allocation8 + $0x2c] sm:$0xf]
        %v354 = vld [vmem:[#allocation8 + $0x30] sm:$0xf]
        %v355 = vld [vmem:[#allocation8 + $0x34] sm:$0xf]
        %v356 = vld [vmem:[#allocation8 + $0x38] sm:$0xf]
        %v357 = vld [vmem:[#allocation8 + $0x3c] sm:$0xf]
        %v358 = vld [vmem:[#allocation2 + $0x4] sm:$0x1]
        %s359 = scalar_lea.vmem [#allocation8], 64
        %v360 = vld [vmem:[%s359] sm:$0xf]
        %v361 = vld [vmem:[%s359 + $0x4] sm:$0xf]
        %v362 = vld [vmem:[%s359 + $0x8] sm:$0xf]
        %v363 = vld [vmem:[%s359 + $0xc] sm:$0xf]
        %v364 = vld [vmem:[%s359 + $0x10] sm:$0xf]
        %v365 = vld [vmem:[%s359 + $0x14] sm:$0xf]
        %v366 = vld [vmem:[%s359 + $0x18] sm:$0xf]
        %v367 = vld [vmem:[%s359 + $0x1c] sm:$0xf]
        %v368 = vld [vmem:[%s359 + $0x20] sm:$0xf]
        %v369 = vld [vmem:[%s359 + $0x24] sm:$0xf]
        %v370 = vld [vmem:[%s359 + $0x28] sm:$0xf]
        %v371 = vld [vmem:[%s359 + $0x2c] sm:$0xf]
        %v372 = vld [vmem:[%s359 + $0x30] sm:$0xf]
        %v373 = vld [vmem:[%s359 + $0x34] sm:$0xf]
        %v374 = vld [vmem:[%s359 + $0x38] sm:$0xf]
        %v375 = vld [vmem:[%s359 + $0x3c] sm:$0xf]
        %v378 = vunpack.c.l.b16 %v341
        %v379 = vunpack.c.l.b16 %v358
        %v380 = vpack.c.b16 %v379, %v378
        %v382 = vshrl.u32 %v380, 16
        %v384 = vshll.u32 %v380, 16
        %v386 = vrot.slane %v384, 1
        %v387 = vor.u32 %v382, %v386
        %v405 = vunpack.c.l.b16 %v360
        %v406 = vunpack.c.l.b16 %v361
        %v407 = vunpack.c.l.b16 %v362
        %v408 = vunpack.c.l.b16 %v363
        %v409 = vunpack.c.l.b16 %v364
        %v410 = vunpack.c.l.b16 %v365
        %v411 = vunpack.c.l.b16 %v366
        %v412 = vunpack.c.l.b16 %v367
        %v413 = vunpack.c.l.b16 %v368
        %v414 = vunpack.c.l.b16 %v369
        %v415 = vunpack.c.l.b16 %v370
        %v416 = vunpack.c.l.b16 %v371
        %v417 = vunpack.c.l.b16 %v372
        %v418 = vunpack.c.l.b16 %v373
        %v419 = vunpack.c.l.b16 %v374
        %v420 = vunpack.c.l.b16 %v375
        %v421 = vpack.c.b16 %v406, %v405
        %v422 = vpack.c.b16 %v408, %v407
        %v423 = vpack.c.b16 %v410, %v409
        %v424 = vpack.c.b16 %v412, %v411
        %v425 = vpack.c.b16 %v414, %v413
        %v426 = vpack.c.b16 %v416, %v415
        %v427 = vpack.c.b16 %v418, %v417
        %v428 = vpack.c.b16 %v420, %v419
        %437 = vmatprep.subr.bf16.mxu0 0
        %438 = vmatpush1.bf16.msra.mxu0 %v428
        %439 = vmatprep.subr.bf16.mxu0 0
        %440 = vmatpush1.bf16.msra.mxu0 %v427
        %441 = vmatprep.subr.bf16.mxu0 0
        %442 = vmatpush1.bf16.msra.mxu0 %v426
        %443 = vmatprep.subr.bf16.mxu0 0
        %444 = vmatpush1.bf16.msra.mxu0 %v425
        %445 = vmatprep.subr.bf16.mxu0 0
        %446 = vmatpush1.bf16.msra.mxu0 %v424
        %447 = vmatprep.subr.bf16.mxu0 0
        %448 = vmatpush1.bf16.msra.mxu0 %v423
        %449 = vmatprep.subr.bf16.mxu0 0
        %450 = vmatpush1.bf16.msra.mxu0 %v422
        %451 = vmatprep.subr.bf16.mxu0 0
        %452 = vmatpush1.bf16.msra.mxu0 %v421
        %453 = vmatprep.subr.bf16.mxu0 0
        %454 = vmatpush2.bf16.msra.mxu0 0
        %455 = vmatprep.subr.bf16.mxu0 0
        %456 = vmatpush2.bf16.msra.mxu0 0
        %457 = vmatprep.subr.bf16.mxu0 0
        %458 = vmatpush2.bf16.msra.mxu0 0
        %459 = vmatprep.subr.bf16.mxu0 0
        %460 = vmatpush2.bf16.msra.mxu0 0
        %461 = vmatprep.subr.bf16.mxu0 0
        %462 = vmatpush2.bf16.msra.mxu0 0
        %463 = vmatprep.subr.bf16.mxu0 0
        %464 = vmatpush2.bf16.msra.mxu0 0
        %465 = vmatprep.subr.bf16.mxu0 0
        %466 = vmatpush2.bf16.msra.mxu0 0
        %467 = vmatprep.subr.bf16.mxu0 0
        %468 = vmatpush2.bf16.msra.mxu0 0
        %469 = vmatprep.mubr.bf16.mxu0 0
        %470 = vmatmul.mubr.bf16.gmra.mxu0 %v387
        %v471 = vpop.f32.mrf.mxu0
        %v472 = vadd.f32 0.0, %v471
        %v473 = vpop.f32.mrf.mxu0
        %v474 = vpop.f32.mrf.mxu0
        %v475 = vpop.f32.mrf.mxu0
        %476 = vdwg.mxu0
        %v493 = vunpack.c.l.b16 %v342
        %v494 = vunpack.c.l.b16 %v343
        %v495 = vunpack.c.l.b16 %v344
        %v496 = vunpack.c.l.b16 %v345
        %v497 = vunpack.c.l.b16 %v346
        %v498 = vunpack.c.l.b16 %v347
        %v499 = vunpack.c.l.b16 %v348
        %v500 = vunpack.c.l.b16 %v349
        %v501 = vunpack.c.l.b16 %v350
        %v502 = vunpack.c.l.b16 %v351
        %v503 = vunpack.c.l.b16 %v352
        %v504 = vunpack.c.l.b16 %v353
        %v505 = vunpack.c.l.b16 %v354
        %v506 = vunpack.c.l.b16 %v355
        %v507 = vunpack.c.l.b16 %v356
        %v508 = vunpack.c.l.b16 %v357
        %v509 = vpack.c.b16 %v494, %v493
        %v510 = vpack.c.b16 %v496, %v495
        %v511 = vpack.c.b16 %v498, %v497
        %v512 = vpack.c.b16 %v500, %v499
        %v513 = vpack.c.b16 %v502, %v501
        %v514 = vpack.c.b16 %v504, %v503
        %v515 = vpack.c.b16 %v506, %v505
        %v516 = vpack.c.b16 %v508, %v507
        %525 = vmatprep.subr.bf16.mxu0 0
        %526 = vmatpush1.bf16.msra.mxu0 %v516
        %527 = vmatprep.subr.bf16.mxu0 0
        %528 = vmatpush1.bf16.msra.mxu0 %v515
        %529 = vmatprep.subr.bf16.mxu0 0
        %530 = vmatpush1.bf16.msra.mxu0 %v514
        %531 = vmatprep.subr.bf16.mxu0 0
        %532 = vmatpush1.bf16.msra.mxu0 %v513
        %533 = vmatprep.subr.bf16.mxu0 0
        %534 = vmatpush1.bf16.msra.mxu0 %v512
        %535 = vmatprep.subr.bf16.mxu0 0
        %536 = vmatpush1.bf16.msra.mxu0 %v511
        %537 = vmatprep.subr.bf16.mxu0 0
        %538 = vmatpush1.bf16.msra.mxu0 %v510
        %539 = vmatprep.subr.bf16.mxu0 0
        %540 = vmatpush1.bf16.msra.mxu0 %v509
        %541 = vmatprep.subr.bf16.mxu0 0
        %542 = vmatpush2.bf16.msra.mxu0 0
        %543 = vmatprep.subr.bf16.mxu0 0
        %544 = vmatpush2.bf16.msra.mxu0 0
        %545 = vmatprep.subr.bf16.mxu0 0
        %546 = vmatpush2.bf16.msra.mxu0 0
        %547 = vmatprep.subr.bf16.mxu0 0
        %548 = vmatpush2.bf16.msra.mxu0 0
        %549 = vmatprep.subr.bf16.mxu0 0
        %550 = vmatpush2.bf16.msra.mxu0 0
        %551 = vmatprep.subr.bf16.mxu0 0
        %552 = vmatpush2.bf16.msra.mxu0 0
        %553 = vmatprep.subr.bf16.mxu0 0
        %554 = vmatpush2.bf16.msra.mxu0 0
        %555 = vmatprep.subr.bf16.mxu0 0
        %556 = vmatpush2.bf16.msra.mxu0 0
        %557 = vmatprep.mubr.bf16.mxu0 0
        %558 = vmatmul.mubr.bf16.gmra.mxu0 %v341
        %v559 = vpop.f32.mrf.mxu0
        %v560 = vadd.f32 %v472, %v559
        %v561 = vpop.f32.mrf.mxu0
        %v562 = vpop.f32.mrf.mxu0
        %v563 = vpop.f32.mrf.mxu0
        %564 = vdwg.mxu0
        %v565 = vld [vmem:[#allocation2] sm:$0xe]
        %s566 = scalar_lea.vmem [#allocation8], 128
        %v567 = vld [vmem:[%s566] sm:$0xf]
        %v568 = vld [vmem:[%s566 + $0x4] sm:$0xf]
        %v569 = vld [vmem:[%s566 + $0x8] sm:$0xf]
        %v570 = vld [vmem:[%s566 + $0xc] sm:$0xf]
        %v571 = vld [vmem:[%s566 + $0x10] sm:$0xf]
        %v572 = vld [vmem:[%s566 + $0x14] sm:$0xf]
        %v573 = vld [vmem:[%s566 + $0x18] sm:$0xf]
        %v574 = vld [vmem:[%s566 + $0x1c] sm:$0xf]
        %v575 = vld [vmem:[%s566 + $0x20] sm:$0xf]
        %v576 = vld [vmem:[%s566 + $0x24] sm:$0xf]
        %v577 = vld [vmem:[%s566 + $0x28] sm:$0xf]
        %v578 = vld [vmem:[%s566 + $0x2c] sm:$0xf]
        %v579 = vld [vmem:[%s566 + $0x30] sm:$0xf]
        %v580 = vld [vmem:[%s566 + $0x34] sm:$0xf]
        %v581 = vld [vmem:[%s566 + $0x38] sm:$0xf]
        %v582 = vld [vmem:[%s566 + $0x3c] sm:$0xf]
        %v584 = vunpack.c.l.b16 %v565
        %v585 = vpack.c.b16 %v379, %v584
        %v586 = vrot.slane %v585, 1
        %v604 = vunpack.c.l.b16 %v567
        %v605 = vunpack.c.l.b16 %v568
        %v606 = vunpack.c.l.b16 %v569
        %v607 = vunpack.c.l.b16 %v570
        %v608 = vunpack.c.l.b16 %v571
        %v609 = vunpack.c.l.b16 %v572
        %v610 = vunpack.c.l.b16 %v573
        %v611 = vunpack.c.l.b16 %v574
        %v612 = vunpack.c.l.b16 %v575
        %v613 = vunpack.c.l.b16 %v576
        %v614 = vunpack.c.l.b16 %v577
        %v615 = vunpack.c.l.b16 %v578
        %v616 = vunpack.c.l.b16 %v579
        %v617 = vunpack.c.l.b16 %v580
        %v618 = vunpack.c.l.b16 %v581
        %v619 = vunpack.c.l.b16 %v582
        %v620 = vpack.c.b16 %v605, %v604
        %v621 = vpack.c.b16 %v607, %v606
        %v622 = vpack.c.b16 %v609, %v608
        %v623 = vpack.c.b16 %v611, %v610
        %v624 = vpack.c.b16 %v613, %v612
        %v625 = vpack.c.b16 %v615, %v614
        %v626 = vpack.c.b16 %v617, %v616
        %v627 = vpack.c.b16 %v619, %v618
        %636 = vmatprep.subr.bf16.mxu0 0
        %637 = vmatpush1.bf16.msra.mxu0 %v627
        %638 = vmatprep.subr.bf16.mxu0 0
        %639 = vmatpush1.bf16.msra.mxu0 %v626
        %640 = vmatprep.subr.bf16.mxu0 0
        %641 = vmatpush1.bf16.msra.mxu0 %v625
        %642 = vmatprep.subr.bf16.mxu0 0
        %643 = vmatpush1.bf16.msra.mxu0 %v624
        %644 = vmatprep.subr.bf16.mxu0 0
        %645 = vmatpush1.bf16.msra.mxu0 %v623
        %646 = vmatprep.subr.bf16.mxu0 0
        %647 = vmatpush1.bf16.msra.mxu0 %v622
        %648 = vmatprep.subr.bf16.mxu0 0
        %649 = vmatpush1.bf16.msra.mxu0 %v621
        %650 = vmatprep.subr.bf16.mxu0 0
        %651 = vmatpush1.bf16.msra.mxu0 %v620
        %652 = vmatprep.subr.bf16.mxu0 0
        %653 = vmatpush2.bf16.msra.mxu0 0
        %654 = vmatprep.subr.bf16.mxu0 0
        %655 = vmatpush2.bf16.msra.mxu0 0
        %656 = vmatprep.subr.bf16.mxu0 0
        %657 = vmatpush2.bf16.msra.mxu0 0
        %658 = vmatprep.subr.bf16.mxu0 0
        %659 = vmatpush2.bf16.msra.mxu0 0
        %660 = vmatprep.subr.bf16.mxu0 0
        %661 = vmatpush2.bf16.msra.mxu0 0
        %662 = vmatprep.subr.bf16.mxu0 0
        %663 = vmatpush2.bf16.msra.mxu0 0
        %664 = vmatprep.subr.bf16.mxu0 0
        %665 = vmatpush2.bf16.msra.mxu0 0
        %666 = vmatprep.subr.bf16.mxu0 0
        %667 = vmatpush2.bf16.msra.mxu0 0
        %668 = vmatprep.mubr.bf16.mxu0 0
        %669 = vmatmul.mubr.bf16.gmra.mxu0 %v586
        %v670 = vpop.f32.mrf.mxu0
        %v671 = vadd.f32 0.0, %v670
        %v672 = vpop.f32.mrf.mxu0
        %v673 = vpop.f32.mrf.mxu0
        %v674 = vpop.f32.mrf.mxu0
        %675 = vdwg.mxu0
        %v676 = vadd.f32 %v560, %v671
        %v677 = vld [vmem:[#allocation2 + $0x4] sm:$0x3]
        %s678 = scalar_lea.vmem [#allocation8], 192
        %v679 = vld [vmem:[%s678] sm:$0xf]
        %v680 = vld [vmem:[%s678 + $0x4] sm:$0xf]
        %v681 = vld [vmem:[%s678 + $0x8] sm:$0xf]
        %v682 = vld [vmem:[%s678 + $0xc] sm:$0xf]
        %v683 = vld [vmem:[%s678 + $0x10] sm:$0xf]
        %v684 = vld [vmem:[%s678 + $0x14] sm:$0xf]
        %v685 = vld [vmem:[%s678 + $0x18] sm:$0xf]
        %v686 = vld [vmem:[%s678 + $0x1c] sm:$0xf]
        %v687 = vld [vmem:[%s678 + $0x20] sm:$0xf]
        %v688 = vld [vmem:[%s678 + $0x24] sm:$0xf]
        %v689 = vld [vmem:[%s678 + $0x28] sm:$0xf]
        %v690 = vld [vmem:[%s678 + $0x2c] sm:$0xf]
        %v691 = vld [vmem:[%s678 + $0x30] sm:$0xf]
        %v692 = vld [vmem:[%s678 + $0x34] sm:$0xf]
        %v693 = vld [vmem:[%s678 + $0x38] sm:$0xf]
        %v694 = vld [vmem:[%s678 + $0x3c] sm:$0xf]
        %v696 = vunpack.c.l.b16 %v677
        %v697 = vpack.c.b16 %v696, %v584
        %v699 = vshrl.u32 %v697, 16
        %v701 = vrot.slane %v699, 1
        %v702 = vshll.u32 %v697, 16
        %v704 = vrot.slane %v702, 2
        %v705 = vor.u32 %v701, %v704
        %v723 = vunpack.c.l.b16 %v679
        %v724 = vunpack.c.l.b16 %v680
        %v725 = vunpack.c.l.b16 %v681
        %v726 = vunpack.c.l.b16 %v682
        %v727 = vunpack.c.l.b16 %v683
        %v728 = vunpack.c.l.b16 %v684
        %v729 = vunpack.c.l.b16 %v685
        %v730 = vunpack.c.l.b16 %v686
        %v731 = vunpack.c.l.b16 %v687
        %v732 = vunpack.c.l.b16 %v688
        %v733 = vunpack.c.l.b16 %v689
        %v734 = vunpack.c.l.b16 %v690
        %v735 = vunpack.c.l.b16 %v691
        %v736 = vunpack.c.l.b16 %v692
        %v737 = vunpack.c.l.b16 %v693
        %v738 = vunpack.c.l.b16 %v694
        %v739 = vpack.c.b16 %v724, %v723
        %v740 = vpack.c.b16 %v726, %v725
        %v741 = vpack.c.b16 %v728, %v727
        %v742 = vpack.c.b16 %v730, %v729
        %v743 = vpack.c.b16 %v732, %v731
        %v744 = vpack.c.b16 %v734, %v733
        %v745 = vpack.c.b16 %v736, %v735
        %v746 = vpack.c.b16 %v738, %v737
        %755 = vmatprep.subr.bf16.mxu0 0
        %756 = vmatpush1.bf16.msra.mxu0 %v746
        %757 = vmatprep.subr.bf16.mxu0 0
        %758 = vmatpush1.bf16.msra.mxu0 %v745
        %759 = vmatprep.subr.bf16.mxu0 0
        %760 = vmatpush1.bf16.msra.mxu0 %v744
        %761 = vmatprep.subr.bf16.mxu0 0
        %762 = vmatpush1.bf16.msra.mxu0 %v743
        %763 = vmatprep.subr.bf16.mxu0 0
        %764 = vmatpush1.bf16.msra.mxu0 %v742
        %765 = vmatprep.subr.bf16.mxu0 0
        %766 = vmatpush1.bf16.msra.mxu0 %v741
        %767 = vmatprep.subr.bf16.mxu0 0
        %768 = vmatpush1.bf16.msra.mxu0 %v740
        %769 = vmatprep.subr.bf16.mxu0 0
        %770 = vmatpush1.bf16.msra.mxu0 %v739
        %771 = vmatprep.subr.bf16.mxu0 0
        %772 = vmatpush2.bf16.msra.mxu0 0
        %773 = vmatprep.subr.bf16.mxu0 0
        %774 = vmatpush2.bf16.msra.mxu0 0
        %775 = vmatprep.subr.bf16.mxu0 0
        %776 = vmatpush2.bf16.msra.mxu0 0
        %777 = vmatprep.subr.bf16.mxu0 0
        %778 = vmatpush2.bf16.msra.mxu0 0
        %779 = vmatprep.subr.bf16.mxu0 0
        %780 = vmatpush2.bf16.msra.mxu0 0
        %781 = vmatprep.subr.bf16.mxu0 0
        %782 = vmatpush2.bf16.msra.mxu0 0
        %783 = vmatprep.subr.bf16.mxu0 0
        %784 = vmatpush2.bf16.msra.mxu0 0
        %785 = vmatprep.subr.bf16.mxu0 0
        %786 = vmatpush2.bf16.msra.mxu0 0
        %787 = vmatprep.mubr.bf16.mxu0 0
        %788 = vmatmul.mubr.bf16.gmra.mxu0 %v705
        %v789 = vpop.f32.mrf.mxu0
        %v790 = vadd.f32 0.0, %v789
        %v791 = vpop.f32.mrf.mxu0
        %v792 = vpop.f32.mrf.mxu0
        %v793 = vpop.f32.mrf.mxu0
        %794 = vdwg.mxu0
        %v795 = vadd.f32 %v676, %v790
        %v796 = vld [vmem:[#allocation2] sm:$0xc]
        %s797 = scalar_lea.vmem [#allocation8], 256
        %v798 = vld [vmem:[%s797] sm:$0xf]
        %v799 = vld [vmem:[%s797 + $0x4] sm:$0xf]
        %v800 = vld [vmem:[%s797 + $0x8] sm:$0xf]
        %v801 = vld [vmem:[%s797 + $0xc] sm:$0xf]
        %v802 = vld [vmem:[%s797 + $0x10] sm:$0xf]
        %v803 = vld [vmem:[%s797 + $0x14] sm:$0xf]
        %v804 = vld [vmem:[%s797 + $0x18] sm:$0xf]
        %v805 = vld [vmem:[%s797 + $0x1c] sm:$0xf]
        %v806 = vld [vmem:[%s797 + $0x20] sm:$0xf]
        %v807 = vld [vmem:[%s797 + $0x24] sm:$0xf]
        %v808 = vld [vmem:[%s797 + $0x28] sm:$0xf]
        %v809 = vld [vmem:[%s797 + $0x2c] sm:$0xf]
        %v810 = vld [vmem:[%s797 + $0x30] sm:$0xf]
        %v811 = vld [vmem:[%s797 + $0x34] sm:$0xf]
        %v812 = vld [vmem:[%s797 + $0x38] sm:$0xf]
        %v813 = vld [vmem:[%s797 + $0x3c] sm:$0xf]
        %v815 = vunpack.c.l.b16 %v796
        %v816 = vpack.c.b16 %v696, %v815
        %v817 = vrot.slane %v816, 2
        %v835 = vunpack.c.l.b16 %v798
        %v836 = vunpack.c.l.b16 %v799
        %v837 = vunpack.c.l.b16 %v800
        %v838 = vunpack.c.l.b16 %v801
        %v839 = vunpack.c.l.b16 %v802
        %v840 = vunpack.c.l.b16 %v803
        %v841 = vunpack.c.l.b16 %v804
        %v842 = vunpack.c.l.b16 %v805
        %v843 = vunpack.c.l.b16 %v806
        %v844 = vunpack.c.l.b16 %v807
        %v845 = vunpack.c.l.b16 %v808
        %v846 = vunpack.c.l.b16 %v809
        %v847 = vunpack.c.l.b16 %v810
        %v848 = vunpack.c.l.b16 %v811
        %v849 = vunpack.c.l.b16 %v812
        %v850 = vunpack.c.l.b16 %v813
        %v851 = vpack.c.b16 %v836, %v835
        %v852 = vpack.c.b16 %v838, %v837
        %v853 = vpack.c.b16 %v840, %v839
        %v854 = vpack.c.b16 %v842, %v841
        %v855 = vpack.c.b16 %v844, %v843
        %v856 = vpack.c.b16 %v846, %v845
        %v857 = vpack.c.b16 %v848, %v847
        %v858 = vpack.c.b16 %v850, %v849
        %867 = vmatprep.subr.bf16.mxu0 0
        %868 = vmatpush1.bf16.msra.mxu0 %v858
        %869 = vmatprep.subr.bf16.mxu0 0
        %870 = vmatpush1.bf16.msra.mxu0 %v857
        %871 = vmatprep.subr.bf16.mxu0 0
        %872 = vmatpush1.bf16.msra.mxu0 %v856
        %873 = vmatprep.subr.bf16.mxu0 0
        %874 = vmatpush1.bf16.msra.mxu0 %v855
        %875 = vmatprep.subr.bf16.mxu0 0
        %876 = vmatpush1.bf16.msra.mxu0 %v854
        %877 = vmatprep.subr.bf16.mxu0 0
        %878 = vmatpush1.bf16.msra.mxu0 %v853
        %879 = vmatprep.subr.bf16.mxu0 0
        %880 = vmatpush1.bf16.msra.mxu0 %v852
        %881 = vmatprep.subr.bf16.mxu0 0
        %882 = vmatpush1.bf16.msra.mxu0 %v851
        %883 = vmatprep.subr.bf16.mxu0 0
        %884 = vmatpush2.bf16.msra.mxu0 0
        %885 = vmatprep.subr.bf16.mxu0 0
        %886 = vmatpush2.bf16.msra.mxu0 0
        %887 = vmatprep.subr.bf16.mxu0 0
        %888 = vmatpush2.bf16.msra.mxu0 0
        %889 = vmatprep.subr.bf16.mxu0 0
        %890 = vmatpush2.bf16.msra.mxu0 0
        %891 = vmatprep.subr.bf16.mxu0 0
        %892 = vmatpush2.bf16.msra.mxu0 0
        %893 = vmatprep.subr.bf16.mxu0 0
        %894 = vmatpush2.bf16.msra.mxu0 0
        %895 = vmatprep.subr.bf16.mxu0 0
        %896 = vmatpush2.bf16.msra.mxu0 0
        %897 = vmatprep.subr.bf16.mxu0 0
        %898 = vmatpush2.bf16.msra.mxu0 0
        %899 = vmatprep.mubr.bf16.mxu0 0
        %900 = vmatmul.mubr.bf16.gmra.mxu0 %v817
        %v901 = vpop.f32.mrf.mxu0
        %v902 = vadd.f32 0.0, %v901
        %v903 = vpop.f32.mrf.mxu0
        %v904 = vpop.f32.mrf.mxu0
        %v905 = vpop.f32.mrf.mxu0
        %906 = vdwg.mxu0
        %v907 = vadd.f32 %v795, %v902
        %v908 = vld [vmem:[%s4] sm:$0x1]
        %v910 = vlaneseq
        %v911 = vshrl.u32 %v910, 7
        %v912 = vsub.s32 0, %v911
        %v913 = vrot.slane %v908, %v912
        %v915 = vadd.f32 %v907, %v913
        %v916 = vmax.f32 %v915, 0.0
        %917 = vst [vmem:[%s268] sm:$0xff] %v916
        %s918 = sand.u32 %s141, 1
        %s919 = scalar_lea.sflag [#allocation5], %s918
        %s920 = sand.u32 %s141, 1
        %s921 = smul.addr %s920, 8
        %s922 = scalar_lea.vmem [#allocation9], %s921
        // Predicated region
        $region53: #{tpu_custom_call.1} parent=39 // pred_check
          %p923 = pneg %p151
        $region54: #{tpu_custom_call.1} parent=39 // pred_check_branch
          %925 = sbr.rel (%p923) target = $region56
        $region55: #{tpu_custom_call.1} parent=39 // pred_region
          %s927 = ssub.s32 128, 128
          %928 = vsyncadd %s919, %s927
          %s929 = smul.addr %s23, 128
          %s930 = scalar_lea.hbm %s5, %s929
          %s932 = sshll.u32 %s922, 4
          %s933 = int_to_ptr.vmem [resolvable:$true] %s932
          %935 = dma.vmem_to_hbm [thread:$0]  %s933, 128, %s930, %s919
        $region56: #{tpu_custom_call.1} parent=39 // pred_fallthru
          _
      $region40: #{tpu_custom_call.1} parent=5 // pred_fallthru
        _
      %p936 = scmp.le.s32.totalorder 2, %s18
      // Predicated region
      $region57: #{tpu_custom_call.1} parent=5 // pred_check
        %p937 = pneg %p936
      $region58: #{tpu_custom_call.1} parent=5 // pred_check_branch
        %939 = sbr.rel (%p937) target = $region60
      $region59: #{tpu_custom_call.1} parent=5 // pred_region
        %s940 = ssub.s32 %s18, 2
        // Predicated region
        $region61: #{tpu_custom_call.1} parent=59 // pred_check
          %p941 = pneg %p157
        $region62: #{tpu_custom_call.1} parent=59 // pred_check_branch
          %943 = sbr.rel (%p941) target = $region64
        $region63: #{tpu_custom_call.1} parent=59 // pred_region
          %s944 = sand.u32 %s142, 1
          %s945 = scalar_lea.sflag [#allocation5], %s944
          %s946 = sand.u32 %s142, 1
          %s947 = smul.addr %s946, 8
          %s948 = scalar_lea.vmem [#allocation9], %s947
          %949 = dma.done %s945, 128
        $region64: #{tpu_custom_call.1} parent=59 // pred_fallthru
          _
      $region60: #{tpu_custom_call.1} parent=5 // pred_fallthru
        _
    $region6: #{tpu_custom_call.1} parent=1 // loop_footer
      %s22 = sadd.s32 1, %s18
    $region7: #{tpu_custom_call.1} parent=1 // loop_footer_branch
      %17 = sbr.rel target = $region3
    $region8: #{tpu_custom_call.1} parent=1 // loop_exit
      _
    %950 = vsyncpa [#allocation4], 1
    %s951 = scalar_lea.sflag [#allocation4], 1
    %952 = vsyncpa %s951, 1
    %953 = vsyncpa [#allocation7], 1
    %954 = vsyncpa [#allocation5], 1
    %s955 = scalar_lea.sflag [#allocation5], 1
    %956 = vsyncpa %s955, 1

</llo_original>
